<compile_context>
chip_gen: v7x
topology: tpu7x:2x2x1
jax: 0.10.0
libtpu: 0.0.40
codegen_flags: <defaults>
</compile_context>

<pallas_src>
import numpy as np
import jax
import jax.numpy as jnp
from jax.experimental import pallas as pl
from jax.experimental.pallas import tpu as pltpu

CF = 8          # `cf`: number of counted objects -> output feature dim is CF + 1
N_SEG = 16      # counting.PiecewiseLin(16)


def _normalized_plin_weights():
    # torch init: weight = ones(n+1); weight.data[0] = 0
    # forward-time normalisation: w = |w| / sum(|w|)   (f(1) == 1, f monotone)
    w = np.ones((16, N_SEG + 1), dtype=np.float32)
    w[:, 0] = 0.0
    w = np.abs(w)
    return w / w.sum(axis=1, keepdims=True)


F_W = _normalized_plin_weights()   # (16, 17) deterministic PiecewiseLin init parameters
# TODO(synk): F_W is baked at init-time values; a *trained* counting module would need its
#             PiecewiseLin weights passed in as kernel inputs instead of constants.


def _plin(fidx, x):
    """PiecewiseLin f_{fidx}(x) for x in [0, 1].

    With the init weights (w0 = 0, equal segment weights summing to 1) f is exactly the identity
    on [0, 1]; the short-circuit is gated on the actual baked constants, so a general (clip-chain)
    path is kept for non-identity weights."""
    w = F_W[fidx]
    if np.isclose(w[0], 0.0) and np.allclose(w[1:], w[1]):
        return x                                     # identity on [0, 1]
    y = float(N_SEG) * x
    acc = jnp.full_like(x, float(w[0]))
    for j in range(1, N_SEG + 1):
        acc = acc + float(w[j]) * jnp.clip(y - float(j - 1), 0.0, 1.0)
    return acc


def _recip(x):
    # EUP approx reciprocal + one Newton step: ~f32 accurate (so floor() in to_one_hot cannot flip
    # a one-hot bin vs exact division) while keeping the divide off the VPU long-latency path.
    r = pl.reciprocal(x, approx=True)
    return r * (2.0 - x * r)


def _net_kernel(fc_ref, fr_ref, w_ref, b_ref, out_ref):
    # Batch-on-lanes layout: [object j (major axis), object k (sublanes), batch b (lanes)].
    #   fc : (5, K, 1, Nb)   "column" form  fc[c, j, 0, b]   (object j on the major axis)
    #   fr : (5, 1, K, Nb)   "row"    form  fr[c, 0, k, b]   (object k on the sublanes)
    #        channels c = 0..3 -> box [x1, y1, x2, y2];  c = 4 -> attention
    #   w  : (K+1, K+1)      classifier weight  W[c, j]      (y[c, b] = sum_j W[c, j] feats[j, b] + bias[c])
    #   b  : (K+1, 1)
    #   out: (K+1, Nb)       lane-dense output slab (transposed / sliced back in the wrapper)
    k = fr_ref.shape[2]
    nb = fr_ref.shape[3]

    fc = fc_ref[...]
    fr = fr_ref[...]
    x1c, y1c, x2c, y2c, a_c = fc[0], fc[1], fc[2], fc[3], fc[4]          # (K, 1, Nb)
    x1r, y1r, x2r, y2r, a_r = fr[0], fr[1], fr[2], fr[3], fr[4]          # (1, K, Nb)
    att = fr[4, 0]                                                       # (K, Nb) compact form

    # ---- pairwise IoU distance (every (K, K, Nb) intermediate is fully lane-dense) ------------
    area_c = jnp.maximum(x2c - x1c, 0.0) * jnp.maximum(y2c - y1c, 0.0)   # (K, 1, Nb)
    area_r = jnp.maximum(x2r - x1r, 0.0) * jnp.maximum(y2r - y1r, 0.0)   # (1, K, Nb)
    ix = jnp.maximum(jnp.minimum(x2c, x2r) - jnp.maximum(x1c, x1r), 0.0)
    iy = jnp.maximum(jnp.minimum(y2c, y2r) - jnp.maximum(y1c, y1r), 0.0)
    inter = ix * iy                                                      # (K, K, Nb)
    iou = inter * _recip(area_c + area_r - inter + 1e-12)
    distance = 1.0 - iou                                                 # symmetric in (j, k)

    relevancy = a_c * a_r                                                # (K, K, Nb), symmetric

    # ---- intra-object dedup ---------------------------------------------------------------------
    score = _plin(0, relevancy) * _plin(1, distance)
    dedup_score = _plin(3, relevancy) * _plin(4, distance)               # symmetric in (j, k)

    # ---- inter-object dedup (Counter.deduplicate) ------------------------------------------------
    # sim[j, k] = f2(1 - |a_j - a_k|) * prod_i f2(1 - |dedup[i, j] - dedup[i, k]|)
    # K-step loop stays Python-unrolled; each step is a handful of dense VPU ops, one operand is a
    # pure major-axis slice and the other a cheap sublane slice+broadcast (no lane relayouts).
    sim = _plin(2, 1.0 - jnp.abs(a_c - a_r))                             # (K, K, Nb)
    for i in range(k):
        d_ij = dedup_score[:, i:i + 1, :]   # (K, 1, Nb): dedup[j, i] == dedup[i, j] (symmetry)
        d_ik = dedup_score[i:i + 1, :, :]   # (1, K, Nb): dedup[i, k]  (pure addressing)
        sim = sim * _plin(2, 1.0 - jnp.abs(d_ij - d_ik))

    row_sims_r = jnp.sum(sim, axis=0, keepdims=True)    # (1, K, Nb): 8 VPU adds over the major axis
    row_sims_c = jnp.sum(sim, axis=1, keepdims=True)    # (K, 1, Nb): one sublane reduce per slab
    inv_rs_r = _recip(row_sims_r)
    inv_rs_c = _recip(row_sims_c)

    score = score * (inv_rs_c * inv_rs_r)               # score / dedup_per_entry
    correction = _plin(0, att * att) * inv_rs_r[0]      # (K, Nb):  f0(a^2) / dedup_per_row

    total = (jnp.sum(jnp.sum(score, axis=0), axis=0, keepdims=True)
             + jnp.sum(correction, axis=0, keepdims=True))               # (1, Nb)
    total = jnp.sqrt(total + 1e-20)

    # ---- to_one_hot -------------------------------------------------------------------------------
    s = jnp.clip(total, 0.0, float(k))
    i_lo_f = jnp.floor(s)
    frac = s - i_lo_f
    i_lo = i_lo_f.astype(jnp.int32)
    chan = jax.lax.broadcasted_iota(jnp.int32, (k + 1, nb), 0)           # count bin on the sublanes
    tgt_l = (chan == jnp.minimum(i_lo, k)).astype(jnp.float32)
    tgt_r = (chan == jnp.minimum(i_lo + 1, k)).astype(jnp.float32)
    one_hot = (1.0 - frac) * tgt_l + frac * tgt_r                        # (K+1, Nb)

    # ---- confidence --------------------------------------------------------------------------------
    att_conf = jnp.abs(_plin(5, att) - 0.5)                              # (K, Nb)
    dist_conf = jnp.abs(_plin(6, distance) - 0.5)                        # (K, K, Nb)
    conf_in = (jnp.sum(att_conf, axis=0, keepdims=True) * (1.0 / k)
               + jnp.sum(jnp.sum(dist_conf, axis=0), axis=0, keepdims=True) * (1.0 / (k * k)))
    conf = _plin(7, conf_in)                                             # (1, Nb)

    feats = one_hot * conf                                               # (K+1, Nb)

    # ---- classifier: 9x9 weight is far too small for the MXU -> 9 broadcast-FMA VPU steps ----------
    wt = w_ref[...]                                                      # (K+1, K+1)
    out = b_ref[...] + wt[:, 0:1] * feats[0:1, :]                        # (K+1, Nb)
    for j in range(1, k + 1):
        out = out + wt[:, j:j + 1] * feats[j:j + 1, :]
    out_ref[...] = out.astype(out_ref.dtype)                             # one lane-dense store


def _pick_tile(n):
    """Lane-dense batch tile (multiple of 128).

    Large tiles amortize the ~0.35us/step grid overhead; once the batch spans more than one
    128-lane tile the grid is split into >= 2 steps so both v7x TensorCores get work (v5e/v6e have
    a single TC -- harmless there).  With batch on the lanes, live (K, K, tile_n) f32 intermediates
    are ~12 * 128 KiB even at tile_n = 512, far below every generation's scoped-VMEM budget
    (v5e 16 MiB default scoped, v7x 64 MiB physical)."""
    n_tiles = -(-n // 128)              # ceil(n / 128)
    if n_tiles <= 1:
        return 128
    if n_tiles <= 8:
        return 128 * (-(-n_tiles // 2))  # split into ~2 equal grid steps
    return 512


def net_forward(a, b, *, classifier_w, classifier_b):
    """a: attention (N, M) in [0, 1]; b: boxes (N, 4, M).  Returns (N, CF+1)."""
    n, m = a.shape
    K = CF
    assert m >= K, "need at least CF object proposals"

    # TODO(synk): Counter.filter_most_important (torch.topk(sorted=False) + gather of boxes) is
    #             data-dependent and stays in plain-JAX glue; the downstream count computation is
    #             permutation invariant so ordering differences do not change the result.
    att, idx = jax.lax.top_k(a, K)                                   # (N, K)
    boxes = jnp.take_along_axis(b, idx[:, None, :], axis=2)          # (N, 4, K)
    att = att.astype(jnp.float32)
    boxes = boxes.astype(jnp.float32)

    # Batch-on-lanes packing: 5 channels = [x1, y1, x2, y2, attention], objects on sublanes/major,
    # batch on the (128-wide) lane axis.  Both the "column" (object on the major axis) and "row"
    # (object on the sublanes) forms are shipped so the kernel never relayouts; zero padding of the
    # batch is numerically safe (zero boxes/attention produce finite scores that are discarded).
    feat = jnp.concatenate([jnp.transpose(boxes, (1, 2, 0)),         # (4, K, N)
                            jnp.transpose(att, (1, 0))[None]], 0)    # (1, K, N)

    tile_n = _pick_tile(n)
    n_pad = tile_n * (-(-n // tile_n))
    featp = jnp.zeros((5, K, n_pad), jnp.float32).at[:, :, :n].set(feat)
    feat_c = featp[:, :, None, :]        # (5, K, 1, n_pad)  column form
    feat_r = featp[:, None, :, :]        # (5, 1, K, n_pad)  row form

    # nn.Linear: y = x @ W.T + b  ->  y[c] = sum_j W[c, j] x[j] + b[c]; pass W un-transposed.
    wt = classifier_w.astype(jnp.float32)                            # (K+1, K+1)
    bias = classifier_b.astype(jnp.float32).reshape(K + 1, 1)        # (K+1, 1)

    grid = (n_pad // tile_n,)
    out = pl.pallas_call(
        _net_kernel,
        out_shape=jax.ShapeDtypeStruct((K + 1, n_pad), jnp.float32),
        grid_spec=pltpu.PrefetchScalarGridSpec(
            num_scalar_prefetch=0,
            grid=grid,
            in_specs=[
                pl.BlockSpec((5, K, 1, tile_n), lambda i: (0, 0, 0, i)),
                pl.BlockSpec((5, 1, K, tile_n), lambda i: (0, 0, 0, i)),
                pl.BlockSpec((K + 1, K + 1), lambda i: (0, 0)),
                pl.BlockSpec((K + 1, 1), lambda i: (0, 0)),
            ],
            out_specs=pl.BlockSpec((K + 1, tile_n), lambda i: (0, i)),
        ),
        compiler_params=pltpu.CompilerParams(
            dimension_semantics=("parallel",),
            vmem_limit_bytes=32 * 1024 * 1024,   # explicit, well under every generation's budget
        ),
    )(feat_c, feat_r, wt, bias)
    return jnp.transpose(out[:, :n], (1, 0))                         # (N, K+1)


def _net_reference(a, b, classifier_w, classifier_b):
    """Pure-JAX reference of Net.forward (PiecewiseLin at init weights == identity)."""
    K = CF
    att, idx = jax.lax.top_k(a, K)
    boxes = jnp.take_along_axis(b, idx[:, None, :], axis=2)
    att = att.astype(jnp.float32)
    boxes = boxes.astype(jnp.float32)
    x1, y1, x2, y2 = boxes[:, 0], boxes[:, 1], boxes[:, 2], boxes[:, 3]          # (N, K)
    area = jnp.maximum(x2 - x1, 0.0) * jnp.maximum(y2 - y1, 0.0)
    ix = jnp.maximum(jnp.minimum(x2[:, :, None], x2[:, None, :])
                     - jnp.maximum(x1[:, :, None], x1[:, None, :]), 0.0)
    iy = jnp.maximum(jnp.minimum(y2[:, :, None], y2[:, None, :])
                     - jnp.maximum(y1[:, :, None], y1[:, None, :]), 0.0)
    inter = ix * iy
    iou = inter / (area[:, :, None] + area[:, None, :] - inter + 1e-12)
    distance = 1.0 - iou
    relevancy = att[:, :, None] * att[:, None, :]
    score = relevancy * distance
    dedup_score = relevancy * distance
    att_diff = jnp.abs(att[:, :, None] - att[:, None, :])
    score_diff = jnp.abs(dedup_score[:, :, :, None] - dedup_score[:, :, None, :])  # [n, i, j, k]
    sim = jnp.prod(1.0 - score_diff, axis=1) * (1.0 - att_diff)
    row_sims = sim.sum(axis=2)                                                     # (N, K)
    score = score / (row_sims[:, :, None] * row_sims[:, None, :])
    correction = (att * att) / row_sims
    total = jnp.sqrt(score.sum(axis=(1, 2)) + correction.sum(axis=1) + 1e-20)      # (N,)
    s = jnp.clip(total, 0.0, float(K))
    i_lo = jnp.floor(s).astype(jnp.int32)
    frac = s - jnp.floor(s)
    cols = jnp.arange(K + 1)[None, :]
    tgt_l = (cols == jnp.minimum(i_lo, K)[:, None]).astype(jnp.float32)
    tgt_r = (cols == jnp.minimum(i_lo + 1, K)[:, None]).astype(jnp.float32)
    one_hot = (1.0 - frac)[:, None] * tgt_l + frac[:, None] * tgt_r
    conf = jnp.abs(att - 0.5).mean(axis=1) + jnp.abs(distance - 0.5).mean(axis=(1, 2))
    feats = one_hot * conf[:, None]
    return feats @ classifier_w.T.astype(jnp.float32) + classifier_b.astype(jnp.float32)


if __name__ == "__main__":
    key = jax.random.PRNGKey(0)
    k1, k2, k3, k4 = jax.random.split(key, 4)

    N, M = 2, 12
    # attention already sigmoided -> values in [0, 1]
    a = jax.random.uniform(k1, (N, M), dtype=jnp.float32)
    # boxes (N, 4, M): [x1, y1, x2, y2] with x1 <= x2, y1 <= y2
    p1 = jax.random.uniform(k2, (N, 2, M), dtype=jnp.float32)
    p2 = jax.random.uniform(k3, (N, 2, M), dtype=jnp.float32)
    boxes = jnp.concatenate([jnp.minimum(p1, p2), jnp.maximum(p1, p2)], axis=1)

    # classifier params: weight = I (init.eye), bias = default Linear init U(-1/sqrt(in), 1/sqrt(in))
    classifier_w = jnp.eye(CF + 1, dtype=jnp.float32)
    bound = 1.0 / np.sqrt(CF + 1)
    classifier_b = jax.random.uniform(k4, (CF + 1,), minval=-bound, maxval=bound,
                                      dtype=jnp.float32)

    out = net_forward(a, boxes, classifier_w=classifier_w, classifier_b=classifier_b)
    jax.block_until_ready(out)
    assert out.shape == (N, CF + 1)

    ref = _net_reference(a, boxes, classifier_w, classifier_b)
    np.testing.assert_allclose(np.asarray(out), np.asarray(ref), rtol=1e-3, atol=1e-3)

    print("KERNEL_OK")
</pallas_src>

<mosaic_0001>
module attributes {stable_mosaic.version = 11 : i64} {
  func.func @_net_kernel(%arg0: i32, %arg1: memref<5x8x1x128xf32, #tpu.memory_space<vmem>>, %arg2: memref<5x1x8x128xf32, #tpu.memory_space<vmem>>, %arg3: memref<9x9xf32, #tpu.memory_space<vmem>>, %arg4: memref<9x1xf32, #tpu.memory_space<vmem>>, %arg5: memref<9x128xf32, #tpu.memory_space<vmem>>) attributes {dimension_semantics = [#tpu.dimension_semantics<parallel>], iteration_bounds = array<i64: 1>, scalar_prefetch = 0 : i64, scratch_operands = 0 : i64, tpu.core_type = #tpu.core_type<tc>, window_params = [{transform_indices = @transform_0, window_bounds = array<i64: 5, 8, 1, 128>}, {transform_indices = @transform_1, window_bounds = array<i64: 5, 1, 8, 128>}, {pipeline_mode = #tpu.pipeline_mode<synchronous>, transform_indices = @transform_2, window_bounds = array<i64: 9, 9>}, {pipeline_mode = #tpu.pipeline_mode<synchronous>, transform_indices = @transform_3, window_bounds = array<i64: 9, 1>}, {transform_indices = @transform_4, window_bounds = array<i64: 9, 128>}]} {
    %c0 = arith.constant 0 : index
    %c0_0 = arith.constant 0 : index
    %c0_1 = arith.constant 0 : index
    %c0_2 = arith.constant 0 : index
    %0 = vector.load %arg1[%c0, %c0_0, %c0_1, %c0_2] : memref<5x8x1x128xf32, #tpu.memory_space<vmem>>, vector<5x8x1x128xf32>
    %c0_3 = arith.constant 0 : index
    %c0_4 = arith.constant 0 : index
    %c0_5 = arith.constant 0 : index
    %c0_6 = arith.constant 0 : index
    %1 = vector.load %arg2[%c0_3, %c0_4, %c0_5, %c0_6] : memref<5x1x8x128xf32, #tpu.memory_space<vmem>>, vector<5x1x8x128xf32>
    %2 = vector.extract_strided_slice %0 {offsets = [0, 0, 0, 0], sizes = [1, 8, 1, 128], strides = [1, 1, 1, 1]} : vector<5x8x1x128xf32> to vector<1x8x1x128xf32>
    %3 = vector.shape_cast %2 : vector<1x8x1x128xf32> to vector<8x1x128xf32>
    %4 = vector.extract_strided_slice %0 {offsets = [1, 0, 0, 0], sizes = [1, 8, 1, 128], strides = [1, 1, 1, 1]} : vector<5x8x1x128xf32> to vector<1x8x1x128xf32>
    %5 = vector.shape_cast %4 : vector<1x8x1x128xf32> to vector<8x1x128xf32>
    %6 = vector.extract_strided_slice %0 {offsets = [2, 0, 0, 0], sizes = [1, 8, 1, 128], strides = [1, 1, 1, 1]} : vector<5x8x1x128xf32> to vector<1x8x1x128xf32>
    %7 = vector.shape_cast %6 : vector<1x8x1x128xf32> to vector<8x1x128xf32>
    %8 = vector.extract_strided_slice %0 {offsets = [3, 0, 0, 0], sizes = [1, 8, 1, 128], strides = [1, 1, 1, 1]} : vector<5x8x1x128xf32> to vector<1x8x1x128xf32>
    %9 = vector.shape_cast %8 : vector<1x8x1x128xf32> to vector<8x1x128xf32>
    %10 = vector.extract_strided_slice %0 {offsets = [4, 0, 0, 0], sizes = [1, 8, 1, 128], strides = [1, 1, 1, 1]} : vector<5x8x1x128xf32> to vector<1x8x1x128xf32>
    %11 = vector.shape_cast %10 : vector<1x8x1x128xf32> to vector<8x1x128xf32>
    %12 = vector.extract_strided_slice %1 {offsets = [0, 0, 0, 0], sizes = [1, 1, 8, 128], strides = [1, 1, 1, 1]} : vector<5x1x8x128xf32> to vector<1x1x8x128xf32>
    %13 = vector.shape_cast %12 : vector<1x1x8x128xf32> to vector<1x8x128xf32>
    %14 = vector.extract_strided_slice %1 {offsets = [1, 0, 0, 0], sizes = [1, 1, 8, 128], strides = [1, 1, 1, 1]} : vector<5x1x8x128xf32> to vector<1x1x8x128xf32>
    %15 = vector.shape_cast %14 : vector<1x1x8x128xf32> to vector<1x8x128xf32>
    %16 = vector.extract_strided_slice %1 {offsets = [2, 0, 0, 0], sizes = [1, 1, 8, 128], strides = [1, 1, 1, 1]} : vector<5x1x8x128xf32> to vector<1x1x8x128xf32>
    %17 = vector.shape_cast %16 : vector<1x1x8x128xf32> to vector<1x8x128xf32>
    %18 = vector.extract_strided_slice %1 {offsets = [3, 0, 0, 0], sizes = [1, 1, 8, 128], strides = [1, 1, 1, 1]} : vector<5x1x8x128xf32> to vector<1x1x8x128xf32>
    %19 = vector.shape_cast %18 : vector<1x1x8x128xf32> to vector<1x8x128xf32>
    %20 = vector.extract_strided_slice %1 {offsets = [4, 0, 0, 0], sizes = [1, 1, 8, 128], strides = [1, 1, 1, 1]} : vector<5x1x8x128xf32> to vector<1x1x8x128xf32>
    %21 = vector.shape_cast %20 : vector<1x1x8x128xf32> to vector<1x8x128xf32>
    %22 = vector.extract_strided_slice %1 {offsets = [4, 0, 0, 0], sizes = [1, 1, 8, 128], strides = [1, 1, 1, 1]} : vector<5x1x8x128xf32> to vector<1x1x8x128xf32>
    %23 = vector.shape_cast %22 : vector<1x1x8x128xf32> to vector<8x128xf32>
    %24 = arith.subf %7, %3 : vector<8x1x128xf32>
    %cst = arith.constant 0.000000e+00 : f32
    %25 = vector.broadcast %cst : f32 to vector<8x1x128xf32>
    %26 = arith.maximumf %24, %25 : vector<8x1x128xf32>
    %27 = arith.subf %9, %5 : vector<8x1x128xf32>
    %cst_7 = arith.constant 0.000000e+00 : f32
    %28 = vector.broadcast %cst_7 : f32 to vector<8x1x128xf32>
    %29 = arith.maximumf %27, %28 : vector<8x1x128xf32>
    %30 = arith.mulf %26, %29 : vector<8x1x128xf32>
    %31 = arith.subf %17, %13 : vector<1x8x128xf32>
    %cst_8 = arith.constant 0.000000e+00 : f32
    %32 = vector.broadcast %cst_8 : f32 to vector<1x8x128xf32>
    %33 = arith.maximumf %31, %32 : vector<1x8x128xf32>
    %34 = arith.subf %19, %15 : vector<1x8x128xf32>
    %cst_9 = arith.constant 0.000000e+00 : f32
    %35 = vector.broadcast %cst_9 : f32 to vector<1x8x128xf32>
    %36 = arith.maximumf %34, %35 : vector<1x8x128xf32>
    %37 = arith.mulf %33, %36 : vector<1x8x128xf32>
    %38 = vector.broadcast %7 : vector<8x1x128xf32> to vector<8x8x128xf32>
    %39 = vector.broadcast %17 : vector<1x8x128xf32> to vector<8x8x128xf32>
    %40 = arith.minimumf %38, %39 : vector<8x8x128xf32>
    %41 = vector.broadcast %3 : vector<8x1x128xf32> to vector<8x8x128xf32>
    %42 = vector.broadcast %13 : vector<1x8x128xf32> to vector<8x8x128xf32>
    %43 = arith.maximumf %41, %42 : vector<8x8x128xf32>
    %44 = arith.subf %40, %43 : vector<8x8x128xf32>
    %cst_10 = arith.constant 0.000000e+00 : f32
    %45 = vector.broadcast %cst_10 : f32 to vector<8x8x128xf32>
    %46 = arith.maximumf %44, %45 : vector<8x8x128xf32>
    %47 = vector.broadcast %9 : vector<8x1x128xf32> to vector<8x8x128xf32>
    %48 = vector.broadcast %19 : vector<1x8x128xf32> to vector<8x8x128xf32>
    %49 = arith.minimumf %47, %48 : vector<8x8x128xf32>
    %50 = vector.broadcast %5 : vector<8x1x128xf32> to vector<8x8x128xf32>
    %51 = vector.broadcast %15 : vector<1x8x128xf32> to vector<8x8x128xf32>
    %52 = arith.maximumf %50, %51 : vector<8x8x128xf32>
    %53 = arith.subf %49, %52 : vector<8x8x128xf32>
    %cst_11 = arith.constant 0.000000e+00 : f32
    %54 = vector.broadcast %cst_11 : f32 to vector<8x8x128xf32>
    %55 = arith.maximumf %53, %54 : vector<8x8x128xf32>
    %56 = arith.mulf %46, %55 : vector<8x8x128xf32>
    %57 = vector.broadcast %30 : vector<8x1x128xf32> to vector<8x8x128xf32>
    %58 = vector.broadcast %37 : vector<1x8x128xf32> to vector<8x8x128xf32>
    %59 = arith.addf %57, %58 : vector<8x8x128xf32>
    %60 = arith.subf %59, %56 : vector<8x8x128xf32>
    %cst_12 = arith.constant 9.99999996E-13 : f32
    %61 = vector.broadcast %cst_12 : f32 to vector<8x8x128xf32>
    %62 = arith.addf %60, %61 : vector<8x8x128xf32>
    %63 = tpu.reciprocal %62 {approx = true} : vector<8x8x128xf32> -> vector<8x8x128xf32>
    %64 = arith.mulf %62, %63 : vector<8x8x128xf32>
    %cst_13 = arith.constant 2.000000e+00 : f32
    %65 = vector.broadcast %cst_13 : f32 to vector<8x8x128xf32>
    %66 = arith.subf %65, %64 : vector<8x8x128xf32>
    %67 = arith.mulf %63, %66 : vector<8x8x128xf32>
    %68 = arith.mulf %56, %67 : vector<8x8x128xf32>
    %cst_14 = arith.constant 1.000000e+00 : f32
    %69 = vector.broadcast %cst_14 : f32 to vector<8x8x128xf32>
    %70 = arith.subf %69, %68 : vector<8x8x128xf32>
    %71 = vector.broadcast %11 : vector<8x1x128xf32> to vector<8x8x128xf32>
    %72 = vector.broadcast %21 : vector<1x8x128xf32> to vector<8x8x128xf32>
    %73 = arith.mulf %71, %72 : vector<8x8x128xf32>
    %74 = arith.mulf %73, %70 : vector<8x8x128xf32>
    %75 = arith.mulf %73, %70 : vector<8x8x128xf32>
    %76 = vector.broadcast %11 : vector<8x1x128xf32> to vector<8x8x128xf32>
    %77 = vector.broadcast %21 : vector<1x8x128xf32> to vector<8x8x128xf32>
    %78 = arith.subf %76, %77 : vector<8x8x128xf32>
    %79 = math.absf %78 : vector<8x8x128xf32>
    %cst_15 = arith.constant 1.000000e+00 : f32
    %80 = vector.broadcast %cst_15 : f32 to vector<8x8x128xf32>
    %81 = arith.subf %80, %79 : vector<8x8x128xf32>
    %82 = vector.extract_strided_slice %75 {offsets = [0, 0, 0], sizes = [8, 1, 128], strides = [1, 1, 1]} : vector<8x8x128xf32> to vector<8x1x128xf32>
    %83 = vector.extract_strided_slice %75 {offsets = [0, 0, 0], sizes = [1, 8, 128], strides = [1, 1, 1]} : vector<8x8x128xf32> to vector<1x8x128xf32>
    %84 = vector.broadcast %82 : vector<8x1x128xf32> to vector<8x8x128xf32>
    %85 = vector.broadcast %83 : vector<1x8x128xf32> to vector<8x8x128xf32>
    %86 = arith.subf %84, %85 : vector<8x8x128xf32>
    %87 = math.absf %86 : vector<8x8x128xf32>
    %cst_16 = arith.constant 1.000000e+00 : f32
    %88 = vector.broadcast %cst_16 : f32 to vector<8x8x128xf32>
    %89 = arith.subf %88, %87 : vector<8x8x128xf32>
    %90 = arith.mulf %81, %89 : vector<8x8x128xf32>
    %91 = vector.extract_strided_slice %75 {offsets = [0, 1, 0], sizes = [8, 1, 128], strides = [1, 1, 1]} : vector<8x8x128xf32> to vector<8x1x128xf32>
    %92 = vector.extract_strided_slice %75 {offsets = [1, 0, 0], sizes = [1, 8, 128], strides = [1, 1, 1]} : vector<8x8x128xf32> to vector<1x8x128xf32>
    %93 = vector.broadcast %91 : vector<8x1x128xf32> to vector<8x8x128xf32>
    %94 = vector.broadcast %92 : vector<1x8x128xf32> to vector<8x8x128xf32>
    %95 = arith.subf %93, %94 : vector<8x8x128xf32>
    %96 = math.absf %95 : vector<8x8x128xf32>
    %cst_17 = arith.constant 1.000000e+00 : f32
    %97 = vector.broadcast %cst_17 : f32 to vector<8x8x128xf32>
    %98 = arith.subf %97, %96 : vector<8x8x128xf32>
    %99 = arith.mulf %90, %98 : vector<8x8x128xf32>
    %100 = vector.extract_strided_slice %75 {offsets = [0, 2, 0], sizes = [8, 1, 128], strides = [1, 1, 1]} : vector<8x8x128xf32> to vector<8x1x128xf32>
    %101 = vector.extract_strided_slice %75 {offsets = [2, 0, 0], sizes = [1, 8, 128], strides = [1, 1, 1]} : vector<8x8x128xf32> to vector<1x8x128xf32>
    %102 = vector.broadcast %100 : vector<8x1x128xf32> to vector<8x8x128xf32>
    %103 = vector.broadcast %101 : vector<1x8x128xf32> to vector<8x8x128xf32>
    %104 = arith.subf %102, %103 : vector<8x8x128xf32>
    %105 = math.absf %104 : vector<8x8x128xf32>
    %cst_18 = arith.constant 1.000000e+00 : f32
    %106 = vector.broadcast %cst_18 : f32 to vector<8x8x128xf32>
    %107 = arith.subf %106, %105 : vector<8x8x128xf32>
    %108 = arith.mulf %99, %107 : vector<8x8x128xf32>
    %109 = vector.extract_strided_slice %75 {offsets = [0, 3, 0], sizes = [8, 1, 128], strides = [1, 1, 1]} : vector<8x8x128xf32> to vector<8x1x128xf32>
    %110 = vector.extract_strided_slice %75 {offsets = [3, 0, 0], sizes = [1, 8, 128], strides = [1, 1, 1]} : vector<8x8x128xf32> to vector<1x8x128xf32>
    %111 = vector.broadcast %109 : vector<8x1x128xf32> to vector<8x8x128xf32>
    %112 = vector.broadcast %110 : vector<1x8x128xf32> to vector<8x8x128xf32>
    %113 = arith.subf %111, %112 : vector<8x8x128xf32>
    %114 = math.absf %113 : vector<8x8x128xf32>
    %cst_19 = arith.constant 1.000000e+00 : f32
    %115 = vector.broadcast %cst_19 : f32 to vector<8x8x128xf32>
    %116 = arith.subf %115, %114 : vector<8x8x128xf32>
    %117 = arith.mulf %108, %116 : vector<8x8x128xf32>
    %118 = vector.extract_strided_slice %75 {offsets = [0, 4, 0], sizes = [8, 1, 128], strides = [1, 1, 1]} : vector<8x8x128xf32> to vector<8x1x128xf32>
    %119 = vector.extract_strided_slice %75 {offsets = [4, 0, 0], sizes = [1, 8, 128], strides = [1, 1, 1]} : vector<8x8x128xf32> to vector<1x8x128xf32>
    %120 = vector.broadcast %118 : vector<8x1x128xf32> to vector<8x8x128xf32>
    %121 = vector.broadcast %119 : vector<1x8x128xf32> to vector<8x8x128xf32>
    %122 = arith.subf %120, %121 : vector<8x8x128xf32>
    %123 = math.absf %122 : vector<8x8x128xf32>
    %cst_20 = arith.constant 1.000000e+00 : f32
    %124 = vector.broadcast %cst_20 : f32 to vector<8x8x128xf32>
    %125 = arith.subf %124, %123 : vector<8x8x128xf32>
    %126 = arith.mulf %117, %125 : vector<8x8x128xf32>
    %127 = vector.extract_strided_slice %75 {offsets = [0, 5, 0], sizes = [8, 1, 128], strides = [1, 1, 1]} : vector<8x8x128xf32> to vector<8x1x128xf32>
    %128 = vector.extract_strided_slice %75 {offsets = [5, 0, 0], sizes = [1, 8, 128], strides = [1, 1, 1]} : vector<8x8x128xf32> to vector<1x8x128xf32>
    %129 = vector.broadcast %127 : vector<8x1x128xf32> to vector<8x8x128xf32>
    %130 = vector.broadcast %128 : vector<1x8x128xf32> to vector<8x8x128xf32>
    %131 = arith.subf %129, %130 : vector<8x8x128xf32>
    %132 = math.absf %131 : vector<8x8x128xf32>
    %cst_21 = arith.constant 1.000000e+00 : f32
    %133 = vector.broadcast %cst_21 : f32 to vector<8x8x128xf32>
    %134 = arith.subf %133, %132 : vector<8x8x128xf32>
    %135 = arith.mulf %126, %134 : vector<8x8x128xf32>
    %136 = vector.extract_strided_slice %75 {offsets = [0, 6, 0], sizes = [8, 1, 128], strides = [1, 1, 1]} : vector<8x8x128xf32> to vector<8x1x128xf32>
    %137 = vector.extract_strided_slice %75 {offsets = [6, 0, 0], sizes = [1, 8, 128], strides = [1, 1, 1]} : vector<8x8x128xf32> to vector<1x8x128xf32>
    %138 = vector.broadcast %136 : vector<8x1x128xf32> to vector<8x8x128xf32>
    %139 = vector.broadcast %137 : vector<1x8x128xf32> to vector<8x8x128xf32>
    %140 = arith.subf %138, %139 : vector<8x8x128xf32>
    %141 = math.absf %140 : vector<8x8x128xf32>
    %cst_22 = arith.constant 1.000000e+00 : f32
    %142 = vector.broadcast %cst_22 : f32 to vector<8x8x128xf32>
    %143 = arith.subf %142, %141 : vector<8x8x128xf32>
    %144 = arith.mulf %135, %143 : vector<8x8x128xf32>
    %145 = vector.extract_strided_slice %75 {offsets = [0, 7, 0], sizes = [8, 1, 128], strides = [1, 1, 1]} : vector<8x8x128xf32> to vector<8x1x128xf32>
    %146 = vector.extract_strided_slice %75 {offsets = [7, 0, 0], sizes = [1, 8, 128], strides = [1, 1, 1]} : vector<8x8x128xf32> to vector<1x8x128xf32>
    %147 = vector.broadcast %145 : vector<8x1x128xf32> to vector<8x8x128xf32>
    %148 = vector.broadcast %146 : vector<1x8x128xf32> to vector<8x8x128xf32>
    %149 = arith.subf %147, %148 : vector<8x8x128xf32>
    %150 = math.absf %149 : vector<8x8x128xf32>
    %cst_23 = arith.constant 1.000000e+00 : f32
    %151 = vector.broadcast %cst_23 : f32 to vector<8x8x128xf32>
    %152 = arith.subf %151, %150 : vector<8x8x128xf32>
    %153 = arith.mulf %144, %152 : vector<8x8x128xf32>
    %cst_24 = arith.constant dense<0.000000e+00> : vector<8x128xf32>
    %154 = vector.multi_reduction <add>, %153, %cst_24 [0] : vector<8x8x128xf32> to vector<8x128xf32>
    %155 = vector.shape_cast %154 : vector<8x128xf32> to vector<1x8x128xf32>
    %cst_25 = arith.constant dense<0.000000e+00> : vector<8x128xf32>
    %156 = vector.multi_reduction <add>, %153, %cst_25 [1] : vector<8x8x128xf32> to vector<8x128xf32>
    %157 = vector.shape_cast %156 : vector<8x128xf32> to vector<8x1x128xf32>
    %158 = tpu.reciprocal %155 {approx = true} : vector<1x8x128xf32> -> vector<1x8x128xf32>
    %159 = arith.mulf %155, %158 : vector<1x8x128xf32>
    %cst_26 = arith.constant 2.000000e+00 : f32
    %160 = vector.broadcast %cst_26 : f32 to vector<1x8x128xf32>
    %161 = arith.subf %160, %159 : vector<1x8x128xf32>
    %162 = arith.mulf %158, %161 : vector<1x8x128xf32>
    %163 = tpu.reciprocal %157 {approx = true} : vector<8x1x128xf32> -> vector<8x1x128xf32>
    %164 = arith.mulf %157, %163 : vector<8x1x128xf32>
    %cst_27 = arith.constant 2.000000e+00 : f32
    %165 = vector.broadcast %cst_27 : f32 to vector<8x1x128xf32>
    %166 = arith.subf %165, %164 : vector<8x1x128xf32>
    %167 = arith.mulf %163, %166 : vector<8x1x128xf32>
    %168 = vector.broadcast %167 : vector<8x1x128xf32> to vector<8x8x128xf32>
    %169 = vector.broadcast %162 : vector<1x8x128xf32> to vector<8x8x128xf32>
    %170 = arith.mulf %168, %169 : vector<8x8x128xf32>
    %171 = arith.mulf %74, %170 : vector<8x8x128xf32>
    %172 = arith.mulf %23, %23 : vector<8x128xf32>
    %173 = vector.shape_cast %162 : vector<1x8x128xf32> to vector<8x128xf32>
    %174 = arith.mulf %172, %173 : vector<8x128xf32>
    %cst_28 = arith.constant dense<0.000000e+00> : vector<8x128xf32>
    %175 = vector.multi_reduction <add>, %171, %cst_28 [0] : vector<8x8x128xf32> to vector<8x128xf32>
    %cst_29 = arith.constant dense<0.000000e+00> : vector<128xf32>
    %176 = vector.multi_reduction <add>, %175, %cst_29 [0] : vector<8x128xf32> to vector<128xf32>
    %177 = vector.shape_cast %176 : vector<128xf32> to vector<1x128xf32>
    %cst_30 = arith.constant dense<0.000000e+00> : vector<128xf32>
    %178 = vector.multi_reduction <add>, %174, %cst_30 [0] : vector<8x128xf32> to vector<128xf32>
    %179 = vector.shape_cast %178 : vector<128xf32> to vector<1x128xf32>
    %180 = arith.addf %177, %179 : vector<1x128xf32>
    %cst_31 = arith.constant 9.99999968E-21 : f32
    %181 = vector.broadcast %cst_31 : f32 to vector<1x128xf32>
    %182 = arith.addf %180, %181 : vector<1x128xf32>
    %183 = math.sqrt %182 : vector<1x128xf32>
    %cst_32 = arith.constant 0.000000e+00 : f32
    %cst_33 = arith.constant 8.000000e+00 : f32
    %184 = vector.broadcast %cst_32 : f32 to vector<1x128xf32>
    %185 = arith.maximumf %184, %183 : vector<1x128xf32>
    %186 = vector.broadcast %cst_33 : f32 to vector<1x128xf32>
    %187 = arith.minimumf %186, %185 : vector<1x128xf32>
    %188 = math.floor %187 : vector<1x128xf32>
    %189 = arith.subf %187, %188 : vector<1x128xf32>
    %190 = arith.fptosi %188 : vector<1x128xf32> to vector<1x128xi32>
    %191 = tpu.iota {dimensions = array<i32: 0>} : vector<9x128xi32>
    %c8_i32 = arith.constant 8 : i32
    %192 = vector.broadcast %c8_i32 : i32 to vector<1x128xi32>
    %193 = arith.minsi %190, %192 : vector<1x128xi32>
    %194 = vector.broadcast %193 : vector<1x128xi32> to vector<9x128xi32>
    %195 = arith.cmpi eq, %191, %194 : vector<9x128xi32>
    %196 = arith.extui %195 : vector<9x128xi1> to vector<9x128xi32>
    %197 = arith.sitofp %196 : vector<9x128xi32> to vector<9x128xf32>
    %c1_i32 = arith.constant 1 : i32
    %198 = vector.broadcast %c1_i32 : i32 to vector<1x128xi32>
    %199 = arith.addi %190, %198 : vector<1x128xi32>
    %c8_i32_34 = arith.constant 8 : i32
    %200 = vector.broadcast %c8_i32_34 : i32 to vector<1x128xi32>
    %201 = arith.minsi %199, %200 : vector<1x128xi32>
    %202 = vector.broadcast %201 : vector<1x128xi32> to vector<9x128xi32>
    %203 = arith.cmpi eq, %191, %202 : vector<9x128xi32>
    %204 = arith.extui %203 : vector<9x128xi1> to vector<9x128xi32>
    %205 = arith.sitofp %204 : vector<9x128xi32> to vector<9x128xf32>
    %cst_35 = arith.constant 1.000000e+00 : f32
    %206 = vector.broadcast %cst_35 : f32 to vector<1x128xf32>
    %207 = arith.subf %206, %189 : vector<1x128xf32>
    %208 = vector.broadcast %207 : vector<1x128xf32> to vector<9x128xf32>
    %209 = arith.mulf %208, %197 : vector<9x128xf32>
    %210 = vector.broadcast %189 : vector<1x128xf32> to vector<9x128xf32>
    %211 = arith.mulf %210, %205 : vector<9x128xf32>
    %212 = arith.addf %209, %211 : vector<9x128xf32>
    %cst_36 = arith.constant 5.000000e-01 : f32
    %213 = vector.broadcast %cst_36 : f32 to vector<8x128xf32>
    %214 = arith.subf %23, %213 : vector<8x128xf32>
    %215 = math.absf %214 : vector<8x128xf32>
    %cst_37 = arith.constant 5.000000e-01 : f32
    %216 = vector.broadcast %cst_37 : f32 to vector<8x8x128xf32>
    %217 = arith.subf %70, %216 : vector<8x8x128xf32>
    %218 = math.absf %217 : vector<8x8x128xf32>
    %cst_38 = arith.constant dense<0.000000e+00> : vector<128xf32>
    %219 = vector.multi_reduction <add>, %215, %cst_38 [0] : vector<8x128xf32> to vector<128xf32>
    %220 = vector.shape_cast %219 : vector<128xf32> to vector<1x128xf32>
    %cst_39 = arith.constant 1.250000e-01 : f32
    %221 = vector.broadcast %cst_39 : f32 to vector<1x128xf32>
    %222 = arith.mulf %220, %221 : vector<1x128xf32>
    %cst_40 = arith.constant dense<0.000000e+00> : vector<8x128xf32>
    %223 = vector.multi_reduction <add>, %218, %cst_40 [0] : vector<8x8x128xf32> to vector<8x128xf32>
    %cst_41 = arith.constant dense<0.000000e+00> : vector<128xf32>
    %224 = vector.multi_reduction <add>, %223, %cst_41 [0] : vector<8x128xf32> to vector<128xf32>
    %225 = vector.shape_cast %224 : vector<128xf32> to vector<1x128xf32>
    %cst_42 = arith.constant 1.562500e-02 : f32
    %226 = vector.broadcast %cst_42 : f32 to vector<1x128xf32>
    %227 = arith.mulf %225, %226 : vector<1x128xf32>
    %228 = arith.addf %222, %227 : vector<1x128xf32>
    %229 = vector.broadcast %228 : vector<1x128xf32> to vector<9x128xf32>
    %230 = arith.mulf %212, %229 : vector<9x128xf32>
    %c0_43 = arith.constant 0 : index
    %c0_44 = arith.constant 0 : index
    %231 = vector.load %arg3[%c0_43, %c0_44] : memref<9x9xf32, #tpu.memory_space<vmem>>, vector<9x9xf32>
    %c0_45 = arith.constant 0 : index
    %c0_46 = arith.constant 0 : index
    %232 = vector.load %arg4[%c0_45, %c0_46] : memref<9x1xf32, #tpu.memory_space<vmem>>, vector<9x1xf32>
    %233 = vector.extract_strided_slice %231 {offsets = [0, 0], sizes = [9, 1], strides = [1, 1]} : vector<9x9xf32> to vector<9x1xf32>
    %234 = vector.extract_strided_slice %230 {offsets = [0, 0], sizes = [1, 128], strides = [1, 1]} : vector<9x128xf32> to vector<1x128xf32>
    %235 = vector.broadcast %233 : vector<9x1xf32> to vector<9x128xf32>
    %236 = vector.broadcast %234 : vector<1x128xf32> to vector<9x128xf32>
    %237 = arith.mulf %235, %236 : vector<9x128xf32>
    %238 = vector.broadcast %232 : vector<9x1xf32> to vector<9x128xf32>
    %239 = arith.addf %238, %237 : vector<9x128xf32>
    %240 = vector.extract_strided_slice %231 {offsets = [0, 1], sizes = [9, 1], strides = [1, 1]} : vector<9x9xf32> to vector<9x1xf32>
    %241 = vector.extract_strided_slice %230 {offsets = [1, 0], sizes = [1, 128], strides = [1, 1]} : vector<9x128xf32> to vector<1x128xf32>
    %242 = vector.broadcast %240 : vector<9x1xf32> to vector<9x128xf32>
    %243 = vector.broadcast %241 : vector<1x128xf32> to vector<9x128xf32>
    %244 = arith.mulf %242, %243 : vector<9x128xf32>
    %245 = arith.addf %239, %244 : vector<9x128xf32>
    %246 = vector.extract_strided_slice %231 {offsets = [0, 2], sizes = [9, 1], strides = [1, 1]} : vector<9x9xf32> to vector<9x1xf32>
    %247 = vector.extract_strided_slice %230 {offsets = [2, 0], sizes = [1, 128], strides = [1, 1]} : vector<9x128xf32> to vector<1x128xf32>
    %248 = vector.broadcast %246 : vector<9x1xf32> to vector<9x128xf32>
    %249 = vector.broadcast %247 : vector<1x128xf32> to vector<9x128xf32>
    %250 = arith.mulf %248, %249 : vector<9x128xf32>
    %251 = arith.addf %245, %250 : vector<9x128xf32>
    %252 = vector.extract_strided_slice %231 {offsets = [0, 3], sizes = [9, 1], strides = [1, 1]} : vector<9x9xf32> to vector<9x1xf32>
    %253 = vector.extract_strided_slice %230 {offsets = [3, 0], sizes = [1, 128], strides = [1, 1]} : vector<9x128xf32> to vector<1x128xf32>
    %254 = vector.broadcast %252 : vector<9x1xf32> to vector<9x128xf32>
    %255 = vector.broadcast %253 : vector<1x128xf32> to vector<9x128xf32>
    %256 = arith.mulf %254, %255 : vector<9x128xf32>
    %257 = arith.addf %251, %256 : vector<9x128xf32>
    %258 = vector.extract_strided_slice %231 {offsets = [0, 4], sizes = [9, 1], strides = [1, 1]} : vector<9x9xf32> to vector<9x1xf32>
    %259 = vector.extract_strided_slice %230 {offsets = [4, 0], sizes = [1, 128], strides = [1, 1]} : vector<9x128xf32> to vector<1x128xf32>
    %260 = vector.broadcast %258 : vector<9x1xf32> to vector<9x128xf32>
    %261 = vector.broadcast %259 : vector<1x128xf32> to vector<9x128xf32>
    %262 = arith.mulf %260, %261 : vector<9x128xf32>
    %263 = arith.addf %257, %262 : vector<9x128xf32>
    %264 = vector.extract_strided_slice %231 {offsets = [0, 5], sizes = [9, 1], strides = [1, 1]} : vector<9x9xf32> to vector<9x1xf32>
    %265 = vector.extract_strided_slice %230 {offsets = [5, 0], sizes = [1, 128], strides = [1, 1]} : vector<9x128xf32> to vector<1x128xf32>
    %266 = vector.broadcast %264 : vector<9x1xf32> to vector<9x128xf32>
    %267 = vector.broadcast %265 : vector<1x128xf32> to vector<9x128xf32>
    %268 = arith.mulf %266, %267 : vector<9x128xf32>
    %269 = arith.addf %263, %268 : vector<9x128xf32>
    %270 = vector.extract_strided_slice %231 {offsets = [0, 6], sizes = [9, 1], strides = [1, 1]} : vector<9x9xf32> to vector<9x1xf32>
    %271 = vector.extract_strided_slice %230 {offsets = [6, 0], sizes = [1, 128], strides = [1, 1]} : vector<9x128xf32> to vector<1x128xf32>
    %272 = vector.broadcast %270 : vector<9x1xf32> to vector<9x128xf32>
    %273 = vector.broadcast %271 : vector<1x128xf32> to vector<9x128xf32>
    %274 = arith.mulf %272, %273 : vector<9x128xf32>
    %275 = arith.addf %269, %274 : vector<9x128xf32>
    %276 = vector.extract_strided_slice %231 {offsets = [0, 7], sizes = [9, 1], strides = [1, 1]} : vector<9x9xf32> to vector<9x1xf32>
    %277 = vector.extract_strided_slice %230 {offsets = [7, 0], sizes = [1, 128], strides = [1, 1]} : vector<9x128xf32> to vector<1x128xf32>
    %278 = vector.broadcast %276 : vector<9x1xf32> to vector<9x128xf32>
    %279 = vector.broadcast %277 : vector<1x128xf32> to vector<9x128xf32>
    %280 = arith.mulf %278, %279 : vector<9x128xf32>
    %281 = arith.addf %275, %280 : vector<9x128xf32>
    %282 = vector.extract_strided_slice %231 {offsets = [0, 8], sizes = [9, 1], strides = [1, 1]} : vector<9x9xf32> to vector<9x1xf32>
    %283 = vector.extract_strided_slice %230 {offsets = [8, 0], sizes = [1, 128], strides = [1, 1]} : vector<9x128xf32> to vector<1x128xf32>
    %284 = vector.broadcast %282 : vector<9x1xf32> to vector<9x128xf32>
    %285 = vector.broadcast %283 : vector<1x128xf32> to vector<9x128xf32>
    %286 = arith.mulf %284, %285 : vector<9x128xf32>
    %287 = arith.addf %281, %286 : vector<9x128xf32>
    %c0_47 = arith.constant 0 : index
    %c0_48 = arith.constant 0 : index
    %288 = vector.load %arg5[%c0_47, %c0_48] : memref<9x128xf32, #tpu.memory_space<vmem>>, vector<9x128xf32>
    tpu.vector_store %arg5[%c0_47, %c0_48], %287 {strides = array<i32>} : memref<9x128xf32, #tpu.memory_space<vmem>>, vector<9x128xf32>,
    return
  }
  func.func @transform_0(%arg0: i32) -> (i32, i32, i32, i32) {
    %c0_i32 = arith.constant 0 : i32
    %c0_i32_0 = arith.constant 0 : i32
    %c0_i32_1 = arith.constant 0 : i32
    %c0_i32_2 = arith.constant 0 : i32
    return %c0_i32, %c0_i32_0, %c0_i32_1, %arg0 : i32, i32, i32, i32
  }
  func.func @transform_1(%arg0: i32) -> (i32, i32, i32, i32) {
    %c0_i32 = arith.constant 0 : i32
    %c0_i32_0 = arith.constant 0 : i32
    %c0_i32_1 = arith.constant 0 : i32
    %c0_i32_2 = arith.constant 0 : i32
    return %c0_i32, %c0_i32_0, %c0_i32_1, %arg0 : i32, i32, i32, i32
  }
  func.func @transform_2(%arg0: i32) -> (i32, i32) {
    %c0_i32 = arith.constant 0 : i32
    %c0_i32_0 = arith.constant 0 : i32
    %c0_i32_1 = arith.constant 0 : i32
    return %c0_i32, %c0_i32_0 : i32, i32
  }
  func.func @transform_3(%arg0: i32) -> (i32, i32) {
    %c0_i32 = arith.constant 0 : i32
    %c0_i32_0 = arith.constant 0 : i32
    %c0_i32_1 = arith.constant 0 : i32
    return %c0_i32, %c0_i32_0 : i32, i32
  }
  func.func @transform_4(%arg0: i32) -> (i32, i32) {
    %c0_i32 = arith.constant 0 : i32
    %c0_i32_0 = arith.constant 0 : i32
    return %c0_i32, %arg0 : i32, i32
  }
}

</mosaic_0001>

<llo_original>
// kernel: tpu_custom_call.1
$region0: #{tpu_custom_call.1}
  #allocation0 [shape = 'u32[]', space=smem, size = 0x4, offset = 0x4, fixed_abs, tag = 'smem constant byte address 0x4 - core index']
  #allocation1 [shape = 'u32[144,128]{1,0:T(1,128)}', space=vmem, size = 0x12000, scoped, tag = 'internal scratch']
  %s0 = inlined_call_operand.hbm [shape: f32[5,8,1,128], index: 0, kind: input, shape index: {}]
  %s1 = inlined_call_operand.hbm [shape: f32[5,1,8,128], index: 1, kind: input, shape index: {}]
  %s2 = inlined_call_operand.vmem [shape: f32[9,9], index: 2, kind: input, shape index: {}]
  %s3 = inlined_call_operand.vmem [shape: f32[9,1], index: 3, kind: input, shape index: {}]
  %s4 = inlined_call_operand.hbm [shape: f32[9,128], index: 4, kind: output, shape index: {}]
  %s5 = sld [smem:[#allocation0]]
  $region34: #{tpu_custom_call.1} parent=0
    _
  %s7 = ssub.s32 1, %s5
  %s8 = scalar_select 0, %s7, %s5
  $region1: #{tpu_custom_call.1} parent=0
    #allocation2 [shape = 'u8[20480]{0}', space=vmem, size = 0x5000, scoped, tag = 'input window, operand 0, single buffered']
    #allocation3 [shape = 's32[1]{0}', space=sflag, size = 0x4, scoped, tag = 'scoped memory for tpu_custom_call.1']
    #allocation4 [shape = 's32[1]{0}', space=sflag, size = 0x4, scoped, tag = 'scoped memory for tpu_custom_call.1']
    #allocation5 [shape = 'u8[20480]{0}', space=vmem, size = 0x5000, scoped, tag = 'input window, operand 1, single buffered']
    #allocation6 [shape = 's32[1]{0}', space=sflag, size = 0x4, scoped, tag = 'scoped memory for tpu_custom_call.1']
    #allocation7 [shape = 'u8[8192]{0}', space=vmem, size = 0x2000, scoped, tag = 'output window, operand 0, single buffered']
    %9 = vsyncpa [#allocation3], 0
    %10 = vsyncpa [#allocation6], 0
    %11 = vsyncpa [#allocation4], 0
    // Predicated region
    $region2: #{tpu_custom_call.1} parent=1 // pred_check
      _
    $region3: #{tpu_custom_call.1} parent=1 // pred_check_branch
      %13 = sbr.rel (0) target = $region5
    $region4: #{tpu_custom_call.1} parent=1 // pred_region
      %s15 = ssub.s32 640, 640
      %16 = vsyncadd [#allocation3], %s15
      %s17 = sshll.u32 [#allocation2], 4
      %s18 = int_to_ptr.vmem [resolvable:$true] %s17
      %23 = dma.hbm_to_vmem [thread:$0]  %s0, 640, %s18, [#allocation3], 16, 16, 1
    $region5: #{tpu_custom_call.1} parent=1 // pred_fallthru
      _
    // Predicated region
    $region6: #{tpu_custom_call.1} parent=1 // pred_check
      _
    $region7: #{tpu_custom_call.1} parent=1 // pred_check_branch
      %25 = sbr.rel (0) target = $region9
    $region8: #{tpu_custom_call.1} parent=1 // pred_region
      %s27 = ssub.s32 640, 640
      %28 = vsyncadd [#allocation6], %s27
      %s29 = sshll.u32 [#allocation5], 4
      %s30 = int_to_ptr.vmem [resolvable:$true] %s29
      %35 = dma.hbm_to_vmem [thread:$0]  %s1, 640, %s30, [#allocation6], 128, 128, 8
    $region9: #{tpu_custom_call.1} parent=1 // pred_fallthru
      _
    // Predicated region
    $region10: #{tpu_custom_call.1} parent=1 // pred_check
      _
    $region11: #{tpu_custom_call.1} parent=1 // pred_check_branch
      %37 = sbr.rel (0) target = $region13
    $region12: #{tpu_custom_call.1} parent=1 // pred_region
      _
    $region13: #{tpu_custom_call.1} parent=1 // pred_fallthru
      _
    // Predicated region
    $region14: #{tpu_custom_call.1} parent=1 // pred_check
      _
    $region15: #{tpu_custom_call.1} parent=1 // pred_check_branch
      %39 = sbr.rel (0) target = $region17
    $region16: #{tpu_custom_call.1} parent=1 // pred_region
      _
    $region17: #{tpu_custom_call.1} parent=1 // pred_fallthru
      _
    // Predicated region
    $region18: #{tpu_custom_call.1} parent=1 // pred_check
      _
    $region19: #{tpu_custom_call.1} parent=1 // pred_check_branch
      %41 = sbr.rel (0) target = $region21
    $region20: #{tpu_custom_call.1} parent=1 // pred_region
      %42 = dma.done [#allocation3], 640
    $region21: #{tpu_custom_call.1} parent=1 // pred_fallthru
      _
    // Predicated region
    $region22: #{tpu_custom_call.1} parent=1 // pred_check
      _
    $region23: #{tpu_custom_call.1} parent=1 // pred_check_branch
      %44 = sbr.rel (0) target = $region25
    $region24: #{tpu_custom_call.1} parent=1 // pred_region
      %45 = dma.done [#allocation6], 640
    $region25: #{tpu_custom_call.1} parent=1 // pred_fallthru
      _
    %v46 = vld [vmem:[#allocation2] sm:$0x1]
    %v47 = vld [vmem:[#allocation2 + $0x1] sm:$0x1]
    %v48 = vld [vmem:[#allocation2 + $0x2] sm:$0x1]
    %v49 = vld [vmem:[#allocation2 + $0x3] sm:$0x1]
    %v50 = vld [vmem:[#allocation2 + $0x4] sm:$0x1]
    %v51 = vld [vmem:[#allocation2 + $0x5] sm:$0x1]
    %v52 = vld [vmem:[#allocation2 + $0x6] sm:$0x1]
    %v53 = vld [vmem:[#allocation2 + $0x7] sm:$0x1]
    %v54 = vld [vmem:[#allocation2 + $0x8] sm:$0x1]
    %v55 = vld [vmem:[#allocation2 + $0x9] sm:$0x1]
    %v56 = vld [vmem:[#allocation2 + $0xa] sm:$0x1]
    %v57 = vld [vmem:[#allocation2 + $0xb] sm:$0x1]
    %v58 = vld [vmem:[#allocation2 + $0xc] sm:$0x1]
    %v59 = vld [vmem:[#allocation2 + $0xd] sm:$0x1]
    %v60 = vld [vmem:[#allocation2 + $0xe] sm:$0x1]
    %v61 = vld [vmem:[#allocation2 + $0xf] sm:$0x1]
    %v62 = vld [vmem:[#allocation2 + $0x10] sm:$0x1]
    %v63 = vld [vmem:[#allocation2 + $0x11] sm:$0x1]
    %v64 = vld [vmem:[#allocation2 + $0x12] sm:$0x1]
    %v65 = vld [vmem:[#allocation2 + $0x13] sm:$0x1]
    %v66 = vld [vmem:[#allocation2 + $0x14] sm:$0x1]
    %v67 = vld [vmem:[#allocation2 + $0x15] sm:$0x1]
    %v68 = vld [vmem:[#allocation2 + $0x16] sm:$0x1]
    %v69 = vld [vmem:[#allocation2 + $0x17] sm:$0x1]
    %v70 = vld [vmem:[#allocation2 + $0x18] sm:$0x1]
    %v71 = vld [vmem:[#allocation2 + $0x19] sm:$0x1]
    %v72 = vld [vmem:[#allocation2 + $0x1a] sm:$0x1]
    %v73 = vld [vmem:[#allocation2 + $0x1b] sm:$0x1]
    %v74 = vld [vmem:[#allocation2 + $0x1c] sm:$0x1]
    %v75 = vld [vmem:[#allocation2 + $0x1d] sm:$0x1]
    %v76 = vld [vmem:[#allocation2 + $0x1e] sm:$0x1]
    %v77 = vld [vmem:[#allocation2 + $0x1f] sm:$0x1]
    %v78 = vld [vmem:[#allocation2 + $0x20] sm:$0x1]
    %v79 = vld [vmem:[#allocation2 + $0x21] sm:$0x1]
    %v80 = vld [vmem:[#allocation2 + $0x22] sm:$0x1]
    %v81 = vld [vmem:[#allocation2 + $0x23] sm:$0x1]
    %v82 = vld [vmem:[#allocation2 + $0x24] sm:$0x1]
    %v83 = vld [vmem:[#allocation2 + $0x25] sm:$0x1]
    %v84 = vld [vmem:[#allocation2 + $0x26] sm:$0x1]
    %v85 = vld [vmem:[#allocation2 + $0x27] sm:$0x1]
    %v86 = vld [vmem:[#allocation5] sm:$0xff]
    %v87 = vld [vmem:[#allocation5 + $0x8] sm:$0xff]
    %v88 = vld [vmem:[#allocation5 + $0x10] sm:$0xff]
    %v89 = vld [vmem:[#allocation5 + $0x18] sm:$0xff]
    %v90 = vld [vmem:[#allocation5 + $0x20] sm:$0xff]
    %v91 = vsub.f32 %v62, %v46
    %v92 = vsub.f32 %v63, %v47
    %v93 = vsub.f32 %v64, %v48
    %v94 = vsub.f32 %v65, %v49
    %v95 = vsub.f32 %v66, %v50
    %v96 = vsub.f32 %v67, %v51
    %v97 = vsub.f32 %v68, %v52
    %v98 = vsub.f32 %v69, %v53
    %v99 = vmax.f32 %v91, 0.0
    %v100 = vmax.f32 %v92, 0.0
    %v101 = vmax.f32 %v93, 0.0
    %v102 = vmax.f32 %v94, 0.0
    %v103 = vmax.f32 %v95, 0.0
    %v104 = vmax.f32 %v96, 0.0
    %v105 = vmax.f32 %v97, 0.0
    %v106 = vmax.f32 %v98, 0.0
    %v107 = vsub.f32 %v70, %v54
    %v108 = vsub.f32 %v71, %v55
    %v109 = vsub.f32 %v72, %v56
    %v110 = vsub.f32 %v73, %v57
    %v111 = vsub.f32 %v74, %v58
    %v112 = vsub.f32 %v75, %v59
    %v113 = vsub.f32 %v76, %v60
    %v114 = vsub.f32 %v77, %v61
    %v115 = vmax.f32 %v107, 0.0
    %v116 = vmax.f32 %v108, 0.0
    %v117 = vmax.f32 %v109, 0.0
    %v118 = vmax.f32 %v110, 0.0
    %v119 = vmax.f32 %v111, 0.0
    %v120 = vmax.f32 %v112, 0.0
    %v121 = vmax.f32 %v113, 0.0
    %v122 = vmax.f32 %v114, 0.0
    %v123 = vmul.f32 %v99, %v115
    %v124 = vmul.f32 %v100, %v116
    %v125 = vmul.f32 %v101, %v117
    %v126 = vmul.f32 %v102, %v118
    %v127 = vmul.f32 %v103, %v119
    %v128 = vmul.f32 %v104, %v120
    %v129 = vmul.f32 %v105, %v121
    %v130 = vmul.f32 %v106, %v122
    %v131 = vsub.f32 %v88, %v86
    %v132 = vmax.f32 %v131, 0.0
    %v133 = vsub.f32 %v89, %v87
    %v134 = vmax.f32 %v133, 0.0
    %v135 = vmul.f32 %v132, %v134
    %v144 = vlaneseq
    %v145 = vshrl.u32 %v144, 7
    %v146 = vsub.s32 0, %v145
    %v147 = vrot.slane %v62, %v146
    %v148 = vlaneseq
    %v149 = vshrl.u32 %v148, 7
    %v150 = vsub.s32 0, %v149
    %v151 = vrot.slane %v63, %v150
    %v152 = vlaneseq
    %v153 = vshrl.u32 %v152, 7
    %v154 = vsub.s32 0, %v153
    %v155 = vrot.slane %v64, %v154
    %v156 = vlaneseq
    %v157 = vshrl.u32 %v156, 7
    %v158 = vsub.s32 0, %v157
    %v159 = vrot.slane %v65, %v158
    %v160 = vlaneseq
    %v161 = vshrl.u32 %v160, 7
    %v162 = vsub.s32 0, %v161
    %v163 = vrot.slane %v66, %v162
    %v164 = vlaneseq
    %v165 = vshrl.u32 %v164, 7
    %v166 = vsub.s32 0, %v165
    %v167 = vrot.slane %v67, %v166
    %v168 = vlaneseq
    %v169 = vshrl.u32 %v168, 7
    %v170 = vsub.s32 0, %v169
    %v171 = vrot.slane %v68, %v170
    %v172 = vlaneseq
    %v173 = vshrl.u32 %v172, 7
    %v174 = vsub.s32 0, %v173
    %v175 = vrot.slane %v69, %v174
    %v184 = vmin.f32 %v147, %v88
    %v185 = vmin.f32 %v151, %v88
    %v186 = vmin.f32 %v155, %v88
    %v187 = vmin.f32 %v159, %v88
    %v188 = vmin.f32 %v163, %v88
    %v189 = vmin.f32 %v167, %v88
    %v190 = vmin.f32 %v171, %v88
    %v191 = vmin.f32 %v175, %v88
    %v200 = vlaneseq
    %v201 = vshrl.u32 %v200, 7
    %v202 = vsub.s32 0, %v201
    %v203 = vrot.slane %v46, %v202
    %v204 = vlaneseq
    %v205 = vshrl.u32 %v204, 7
    %v206 = vsub.s32 0, %v205
    %v207 = vrot.slane %v47, %v206
    %v208 = vlaneseq
    %v209 = vshrl.u32 %v208, 7
    %v210 = vsub.s32 0, %v209
    %v211 = vrot.slane %v48, %v210
    %v212 = vlaneseq
    %v213 = vshrl.u32 %v212, 7
    %v214 = vsub.s32 0, %v213
    %v215 = vrot.slane %v49, %v214
    %v216 = vlaneseq
    %v217 = vshrl.u32 %v216, 7
    %v218 = vsub.s32 0, %v217
    %v219 = vrot.slane %v50, %v218
    %v220 = vlaneseq
    %v221 = vshrl.u32 %v220, 7
    %v222 = vsub.s32 0, %v221
    %v223 = vrot.slane %v51, %v222
    %v224 = vlaneseq
    %v225 = vshrl.u32 %v224, 7
    %v226 = vsub.s32 0, %v225
    %v227 = vrot.slane %v52, %v226
    %v228 = vlaneseq
    %v229 = vshrl.u32 %v228, 7
    %v230 = vsub.s32 0, %v229
    %v231 = vrot.slane %v53, %v230
    %v240 = vmax.f32 %v203, %v86
    %v241 = vmax.f32 %v207, %v86
    %v242 = vmax.f32 %v211, %v86
    %v243 = vmax.f32 %v215, %v86
    %v244 = vmax.f32 %v219, %v86
    %v245 = vmax.f32 %v223, %v86
    %v246 = vmax.f32 %v227, %v86
    %v247 = vmax.f32 %v231, %v86
    %v248 = vsub.f32 %v184, %v240
    %v249 = vsub.f32 %v185, %v241
    %v250 = vsub.f32 %v186, %v242
    %v251 = vsub.f32 %v187, %v243
    %v252 = vsub.f32 %v188, %v244
    %v253 = vsub.f32 %v189, %v245
    %v254 = vsub.f32 %v190, %v246
    %v255 = vsub.f32 %v191, %v247
    %v256 = vmax.f32 %v248, 0.0
    %v257 = vmax.f32 %v249, 0.0
    %v258 = vmax.f32 %v250, 0.0
    %v259 = vmax.f32 %v251, 0.0
    %v260 = vmax.f32 %v252, 0.0
    %v261 = vmax.f32 %v253, 0.0
    %v262 = vmax.f32 %v254, 0.0
    %v263 = vmax.f32 %v255, 0.0
    %v272 = vlaneseq
    %v273 = vshrl.u32 %v272, 7
    %v274 = vsub.s32 0, %v273
    %v275 = vrot.slane %v70, %v274
    %v276 = vlaneseq
    %v277 = vshrl.u32 %v276, 7
    %v278 = vsub.s32 0, %v277
    %v279 = vrot.slane %v71, %v278
    %v280 = vlaneseq
    %v281 = vshrl.u32 %v280, 7
    %v282 = vsub.s32 0, %v281
    %v283 = vrot.slane %v72, %v282
    %v284 = vlaneseq
    %v285 = vshrl.u32 %v284, 7
    %v286 = vsub.s32 0, %v285
    %v287 = vrot.slane %v73, %v286
    %v288 = vlaneseq
    %v289 = vshrl.u32 %v288, 7
    %v290 = vsub.s32 0, %v289
    %v291 = vrot.slane %v74, %v290
    %v292 = vlaneseq
    %v293 = vshrl.u32 %v292, 7
    %v294 = vsub.s32 0, %v293
    %v295 = vrot.slane %v75, %v294
    %v296 = vlaneseq
    %v297 = vshrl.u32 %v296, 7
    %v298 = vsub.s32 0, %v297
    %v299 = vrot.slane %v76, %v298
    %v300 = vlaneseq
    %v301 = vshrl.u32 %v300, 7
    %v302 = vsub.s32 0, %v301
    %v303 = vrot.slane %v77, %v302
    %v312 = vmin.f32 %v275, %v89
    %v313 = vmin.f32 %v279, %v89
    %v314 = vmin.f32 %v283, %v89
    %v315 = vmin.f32 %v287, %v89
    %v316 = vmin.f32 %v291, %v89
    %v317 = vmin.f32 %v295, %v89
    %v318 = vmin.f32 %v299, %v89
    %v319 = vmin.f32 %v303, %v89
    %v328 = vlaneseq
    %v329 = vshrl.u32 %v328, 7
    %v330 = vsub.s32 0, %v329
    %v331 = vrot.slane %v54, %v330
    %v332 = vlaneseq
    %v333 = vshrl.u32 %v332, 7
    %v334 = vsub.s32 0, %v333
    %v335 = vrot.slane %v55, %v334
    %v336 = vlaneseq
    %v337 = vshrl.u32 %v336, 7
    %v338 = vsub.s32 0, %v337
    %v339 = vrot.slane %v56, %v338
    %v340 = vlaneseq
    %v341 = vshrl.u32 %v340, 7
    %v342 = vsub.s32 0, %v341
    %v343 = vrot.slane %v57, %v342
    %v344 = vlaneseq
    %v345 = vshrl.u32 %v344, 7
    %v346 = vsub.s32 0, %v345
    %v347 = vrot.slane %v58, %v346
    %v348 = vlaneseq
    %v349 = vshrl.u32 %v348, 7
    %v350 = vsub.s32 0, %v349
    %v351 = vrot.slane %v59, %v350
    %v352 = vlaneseq
    %v353 = vshrl.u32 %v352, 7
    %v354 = vsub.s32 0, %v353
    %v355 = vrot.slane %v60, %v354
    %v356 = vlaneseq
    %v357 = vshrl.u32 %v356, 7
    %v358 = vsub.s32 0, %v357
    %v359 = vrot.slane %v61, %v358
    %v368 = vmax.f32 %v331, %v87
    %v369 = vmax.f32 %v335, %v87
    %v370 = vmax.f32 %v339, %v87
    %v371 = vmax.f32 %v343, %v87
    %v372 = vmax.f32 %v347, %v87
    %v373 = vmax.f32 %v351, %v87
    %v374 = vmax.f32 %v355, %v87
    %v375 = vmax.f32 %v359, %v87
    %v376 = vsub.f32 %v312, %v368
    %v377 = vsub.f32 %v313, %v369
    %v378 = vsub.f32 %v314, %v370
    %v379 = vsub.f32 %v315, %v371
    %v380 = vsub.f32 %v316, %v372
    %v381 = vsub.f32 %v317, %v373
    %v382 = vsub.f32 %v318, %v374
    %v383 = vsub.f32 %v319, %v375
    %v384 = vmax.f32 %v376, 0.0
    %v385 = vmax.f32 %v377, 0.0
    %v386 = vmax.f32 %v378, 0.0
    %v387 = vmax.f32 %v379, 0.0
    %v388 = vmax.f32 %v380, 0.0
    %v389 = vmax.f32 %v381, 0.0
    %v390 = vmax.f32 %v382, 0.0
    %v391 = vmax.f32 %v383, 0.0
    %v392 = vmul.f32 %v256, %v384
    %v393 = vmul.f32 %v257, %v385
    %v394 = vmul.f32 %v258, %v386
    %v395 = vmul.f32 %v259, %v387
    %v396 = vmul.f32 %v260, %v388
    %v397 = vmul.f32 %v261, %v389
    %v398 = vmul.f32 %v262, %v390
    %v399 = vmul.f32 %v263, %v391
    %v408 = vlaneseq
    %v409 = vshrl.u32 %v408, 7
    %v410 = vsub.s32 0, %v409
    %v411 = vrot.slane %v123, %v410
    %v412 = vlaneseq
    %v413 = vshrl.u32 %v412, 7
    %v414 = vsub.s32 0, %v413
    %v415 = vrot.slane %v124, %v414
    %v416 = vlaneseq
    %v417 = vshrl.u32 %v416, 7
    %v418 = vsub.s32 0, %v417
    %v419 = vrot.slane %v125, %v418
    %v420 = vlaneseq
    %v421 = vshrl.u32 %v420, 7
    %v422 = vsub.s32 0, %v421
    %v423 = vrot.slane %v126, %v422
    %v424 = vlaneseq
    %v425 = vshrl.u32 %v424, 7
    %v426 = vsub.s32 0, %v425
    %v427 = vrot.slane %v127, %v426
    %v428 = vlaneseq
    %v429 = vshrl.u32 %v428, 7
    %v430 = vsub.s32 0, %v429
    %v431 = vrot.slane %v128, %v430
    %v432 = vlaneseq
    %v433 = vshrl.u32 %v432, 7
    %v434 = vsub.s32 0, %v433
    %v435 = vrot.slane %v129, %v434
    %v436 = vlaneseq
    %v437 = vshrl.u32 %v436, 7
    %v438 = vsub.s32 0, %v437
    %v439 = vrot.slane %v130, %v438
    %v448 = vadd.f32 %v411, %v135
    %v449 = vadd.f32 %v415, %v135
    %v450 = vadd.f32 %v419, %v135
    %v451 = vadd.f32 %v423, %v135
    %v452 = vadd.f32 %v427, %v135
    %v453 = vadd.f32 %v431, %v135
    %v454 = vadd.f32 %v435, %v135
    %v455 = vadd.f32 %v439, %v135
    %v456 = vsub.f32 %v448, %v392
    %v457 = vsub.f32 %v449, %v393
    %v458 = vsub.f32 %v450, %v394
    %v459 = vsub.f32 %v451, %v395
    %v460 = vsub.f32 %v452, %v396
    %v461 = vsub.f32 %v453, %v397
    %v462 = vsub.f32 %v454, %v398
    %v463 = vsub.f32 %v455, %v399
    %v464 = vadd.f32 %v456, 1e-12
    %v465 = vadd.f32 %v457, 1e-12
    %v466 = vadd.f32 %v458, 1e-12
    %v467 = vadd.f32 %v459, 1e-12
    %v468 = vadd.f32 %v460, 1e-12
    %v469 = vadd.f32 %v461, 1e-12
    %v470 = vadd.f32 %v462, 1e-12
    %v471 = vadd.f32 %v463, 1e-12
    %v472 = vrcp.pop %v464
    %v473 = vrcp.pop %v465
    %v474 = vrcp.pop %v466
    %v475 = vrcp.pop %v467
    %v476 = vrcp.pop %v468
    %v477 = vrcp.pop %v469
    %v478 = vrcp.pop %v470
    %v479 = vrcp.pop %v471
    %v480 = vmul.f32 %v464, %v472
    %v481 = vmul.f32 %v465, %v473
    %v482 = vmul.f32 %v466, %v474
    %v483 = vmul.f32 %v467, %v475
    %v484 = vmul.f32 %v468, %v476
    %v485 = vmul.f32 %v469, %v477
    %v486 = vmul.f32 %v470, %v478
    %v487 = vmul.f32 %v471, %v479
    %v488 = vsub.f32 2.0, %v480
    %v489 = vsub.f32 2.0, %v481
    %v490 = vsub.f32 2.0, %v482
    %v491 = vsub.f32 2.0, %v483
    %v492 = vsub.f32 2.0, %v484
    %v493 = vsub.f32 2.0, %v485
    %v494 = vsub.f32 2.0, %v486
    %v495 = vsub.f32 2.0, %v487
    %v496 = vmul.f32 %v472, %v488
    %v497 = vmul.f32 %v473, %v489
    %v498 = vmul.f32 %v474, %v490
    %v499 = vmul.f32 %v475, %v491
    %v500 = vmul.f32 %v476, %v492
    %v501 = vmul.f32 %v477, %v493
    %v502 = vmul.f32 %v478, %v494
    %v503 = vmul.f32 %v479, %v495
    %v504 = vmul.f32 %v392, %v496
    %v505 = vmul.f32 %v393, %v497
    %v506 = vmul.f32 %v394, %v498
    %v507 = vmul.f32 %v395, %v499
    %v508 = vmul.f32 %v396, %v500
    %v509 = vmul.f32 %v397, %v501
    %v510 = vmul.f32 %v398, %v502
    %v511 = vmul.f32 %v399, %v503
    %v512 = vsub.f32 1.0, %v504
    %v513 = vsub.f32 1.0, %v505
    %v514 = vsub.f32 1.0, %v506
    %v515 = vsub.f32 1.0, %v507
    %v516 = vsub.f32 1.0, %v508
    %v517 = vsub.f32 1.0, %v509
    %v518 = vsub.f32 1.0, %v510
    %v519 = vsub.f32 1.0, %v511
    %v528 = vlaneseq
    %v529 = vshrl.u32 %v528, 7
    %v530 = vsub.s32 0, %v529
    %v531 = vrot.slane %v78, %v530
    %v532 = vlaneseq
    %v533 = vshrl.u32 %v532, 7
    %v534 = vsub.s32 0, %v533
    %v535 = vrot.slane %v79, %v534
    %v536 = vlaneseq
    %v537 = vshrl.u32 %v536, 7
    %v538 = vsub.s32 0, %v537
    %v539 = vrot.slane %v80, %v538
    %v540 = vlaneseq
    %v541 = vshrl.u32 %v540, 7
    %v542 = vsub.s32 0, %v541
    %v543 = vrot.slane %v81, %v542
    %v544 = vlaneseq
    %v545 = vshrl.u32 %v544, 7
    %v546 = vsub.s32 0, %v545
    %v547 = vrot.slane %v82, %v546
    %v548 = vlaneseq
    %v549 = vshrl.u32 %v548, 7
    %v550 = vsub.s32 0, %v549
    %v551 = vrot.slane %v83, %v550
    %v552 = vlaneseq
    %v553 = vshrl.u32 %v552, 7
    %v554 = vsub.s32 0, %v553
    %v555 = vrot.slane %v84, %v554
    %v556 = vlaneseq
    %v557 = vshrl.u32 %v556, 7
    %v558 = vsub.s32 0, %v557
    %v559 = vrot.slane %v85, %v558
    %v568 = vmul.f32 %v531, %v90
    %v569 = vmul.f32 %v535, %v90
    %v570 = vmul.f32 %v539, %v90
    %v571 = vmul.f32 %v543, %v90
    %v572 = vmul.f32 %v547, %v90
    %v573 = vmul.f32 %v551, %v90
    %v574 = vmul.f32 %v555, %v90
    %v575 = vmul.f32 %v559, %v90
    %v576 = vmul.f32 %v568, %v512
    %v577 = vmul.f32 %v569, %v513
    %v578 = vmul.f32 %v570, %v514
    %v579 = vmul.f32 %v571, %v515
    %v580 = vmul.f32 %v572, %v516
    %v581 = vmul.f32 %v573, %v517
    %v582 = vmul.f32 %v574, %v518
    %v583 = vmul.f32 %v575, %v519
    %v584 = vsub.f32 %v531, %v90
    %v585 = vsub.f32 %v535, %v90
    %v586 = vsub.f32 %v539, %v90
    %v587 = vsub.f32 %v543, %v90
    %v588 = vsub.f32 %v547, %v90
    %v589 = vsub.f32 %v551, %v90
    %v590 = vsub.f32 %v555, %v90
    %v591 = vsub.f32 %v559, %v90
    %v592 = vand.u32 2147483647, %v584
    %v593 = vand.u32 2147483647, %v585
    %v594 = vand.u32 2147483647, %v586
    %v595 = vand.u32 2147483647, %v587
    %v596 = vand.u32 2147483647, %v588
    %v597 = vand.u32 2147483647, %v589
    %v598 = vand.u32 2147483647, %v590
    %v599 = vand.u32 2147483647, %v591
    %v600 = vsub.f32 1.0, %v592
    %v601 = vsub.f32 1.0, %v593
    %v602 = vsub.f32 1.0, %v594
    %v603 = vsub.f32 1.0, %v595
    %v604 = vsub.f32 1.0, %v596
    %v605 = vsub.f32 1.0, %v597
    %v606 = vsub.f32 1.0, %v598
    %v607 = vsub.f32 1.0, %v599
    %v608 = vlaneseq
    %v609 = vshrl.u32 %v608, 7
    %v610 = vsub.s32 0, %v609
    %v611 = vrot.slane %v576, %v610
    %v612 = vlaneseq
    %v613 = vshrl.u32 %v612, 7
    %v614 = vsub.s32 0, %v613
    %v615 = vrot.slane %v577, %v614
    %v616 = vlaneseq
    %v617 = vshrl.u32 %v616, 7
    %v618 = vsub.s32 0, %v617
    %v619 = vrot.slane %v578, %v618
    %v620 = vlaneseq
    %v621 = vshrl.u32 %v620, 7
    %v622 = vsub.s32 0, %v621
    %v623 = vrot.slane %v579, %v622
    %v624 = vlaneseq
    %v625 = vshrl.u32 %v624, 7
    %v626 = vsub.s32 0, %v625
    %v627 = vrot.slane %v580, %v626
    %v628 = vlaneseq
    %v629 = vshrl.u32 %v628, 7
    %v630 = vsub.s32 0, %v629
    %v631 = vrot.slane %v581, %v630
    %v632 = vlaneseq
    %v633 = vshrl.u32 %v632, 7
    %v634 = vsub.s32 0, %v633
    %v635 = vrot.slane %v582, %v634
    %v636 = vlaneseq
    %v637 = vshrl.u32 %v636, 7
    %v638 = vsub.s32 0, %v637
    %v639 = vrot.slane %v583, %v638
    %v640 = vsub.f32 %v611, %v576
    %v641 = vsub.f32 %v615, %v576
    %v642 = vsub.f32 %v619, %v576
    %v643 = vsub.f32 %v623, %v576
    %v644 = vsub.f32 %v627, %v576
    %v645 = vsub.f32 %v631, %v576
    %v646 = vsub.f32 %v635, %v576
    %v647 = vsub.f32 %v639, %v576
    %v648 = vand.u32 2147483647, %v640
    %v649 = vand.u32 2147483647, %v641
    %v650 = vand.u32 2147483647, %v642
    %v651 = vand.u32 2147483647, %v643
    %v652 = vand.u32 2147483647, %v644
    %v653 = vand.u32 2147483647, %v645
    %v654 = vand.u32 2147483647, %v646
    %v655 = vand.u32 2147483647, %v647
    %v656 = vsub.f32 1.0, %v648
    %v657 = vsub.f32 1.0, %v649
    %v658 = vsub.f32 1.0, %v650
    %v659 = vsub.f32 1.0, %v651
    %v660 = vsub.f32 1.0, %v652
    %v661 = vsub.f32 1.0, %v653
    %v662 = vsub.f32 1.0, %v654
    %v663 = vsub.f32 1.0, %v655
    %v664 = vmul.f32 %v600, %v656
    %v665 = vmul.f32 %v601, %v657
    %v666 = vmul.f32 %v602, %v658
    %v667 = vmul.f32 %v603, %v659
    %v668 = vmul.f32 %v604, %v660
    %v669 = vmul.f32 %v605, %v661
    %v670 = vmul.f32 %v606, %v662
    %v671 = vmul.f32 %v607, %v663
    %v672 = vlaneseq
    %v673 = vshrl.u32 %v672, 7
    %v674 = vsub.s32 1, %v673
    %v675 = vrot.slane %v576, %v674
    %v676 = vlaneseq
    %v677 = vshrl.u32 %v676, 7
    %v678 = vsub.s32 1, %v677
    %v679 = vrot.slane %v577, %v678
    %v680 = vlaneseq
    %v681 = vshrl.u32 %v680, 7
    %v682 = vsub.s32 1, %v681
    %v683 = vrot.slane %v578, %v682
    %v684 = vlaneseq
    %v685 = vshrl.u32 %v684, 7
    %v686 = vsub.s32 1, %v685
    %v687 = vrot.slane %v579, %v686
    %v688 = vlaneseq
    %v689 = vshrl.u32 %v688, 7
    %v690 = vsub.s32 1, %v689
    %v691 = vrot.slane %v580, %v690
    %v692 = vlaneseq
    %v693 = vshrl.u32 %v692, 7
    %v694 = vsub.s32 1, %v693
    %v695 = vrot.slane %v581, %v694
    %v696 = vlaneseq
    %v697 = vshrl.u32 %v696, 7
    %v698 = vsub.s32 1, %v697
    %v699 = vrot.slane %v582, %v698
    %v700 = vlaneseq
    %v701 = vshrl.u32 %v700, 7
    %v702 = vsub.s32 1, %v701
    %v703 = vrot.slane %v583, %v702
    %v704 = vsub.f32 %v675, %v577
    %v705 = vsub.f32 %v679, %v577
    %v706 = vsub.f32 %v683, %v577
    %v707 = vsub.f32 %v687, %v577
    %v708 = vsub.f32 %v691, %v577
    %v709 = vsub.f32 %v695, %v577
    %v710 = vsub.f32 %v699, %v577
    %v711 = vsub.f32 %v703, %v577
    %v712 = vand.u32 2147483647, %v704
    %v713 = vand.u32 2147483647, %v705
    %v714 = vand.u32 2147483647, %v706
    %v715 = vand.u32 2147483647, %v707
    %v716 = vand.u32 2147483647, %v708
    %v717 = vand.u32 2147483647, %v709
    %v718 = vand.u32 2147483647, %v710
    %v719 = vand.u32 2147483647, %v711
    %v720 = vsub.f32 1.0, %v712
    %v721 = vsub.f32 1.0, %v713
    %v722 = vsub.f32 1.0, %v714
    %v723 = vsub.f32 1.0, %v715
    %v724 = vsub.f32 1.0, %v716
    %v725 = vsub.f32 1.0, %v717
    %v726 = vsub.f32 1.0, %v718
    %v727 = vsub.f32 1.0, %v719
    %v728 = vmul.f32 %v664, %v720
    %v729 = vmul.f32 %v665, %v721
    %v730 = vmul.f32 %v666, %v722
    %v731 = vmul.f32 %v667, %v723
    %v732 = vmul.f32 %v668, %v724
    %v733 = vmul.f32 %v669, %v725
    %v734 = vmul.f32 %v670, %v726
    %v735 = vmul.f32 %v671, %v727
    %v736 = vlaneseq
    %v737 = vshrl.u32 %v736, 7
    %v738 = vsub.s32 2, %v737
    %v739 = vrot.slane %v576, %v738
    %v740 = vlaneseq
    %v741 = vshrl.u32 %v740, 7
    %v742 = vsub.s32 2, %v741
    %v743 = vrot.slane %v577, %v742
    %v744 = vlaneseq
    %v745 = vshrl.u32 %v744, 7
    %v746 = vsub.s32 2, %v745
    %v747 = vrot.slane %v578, %v746
    %v748 = vlaneseq
    %v749 = vshrl.u32 %v748, 7
    %v750 = vsub.s32 2, %v749
    %v751 = vrot.slane %v579, %v750
    %v752 = vlaneseq
    %v753 = vshrl.u32 %v752, 7
    %v754 = vsub.s32 2, %v753
    %v755 = vrot.slane %v580, %v754
    %v756 = vlaneseq
    %v757 = vshrl.u32 %v756, 7
    %v758 = vsub.s32 2, %v757
    %v759 = vrot.slane %v581, %v758
    %v760 = vlaneseq
    %v761 = vshrl.u32 %v760, 7
    %v762 = vsub.s32 2, %v761
    %v763 = vrot.slane %v582, %v762
    %v764 = vlaneseq
    %v765 = vshrl.u32 %v764, 7
    %v766 = vsub.s32 2, %v765
    %v767 = vrot.slane %v583, %v766
    %v768 = vsub.f32 %v739, %v578
    %v769 = vsub.f32 %v743, %v578
    %v770 = vsub.f32 %v747, %v578
    %v771 = vsub.f32 %v751, %v578
    %v772 = vsub.f32 %v755, %v578
    %v773 = vsub.f32 %v759, %v578
    %v774 = vsub.f32 %v763, %v578
    %v775 = vsub.f32 %v767, %v578
    %v776 = vand.u32 2147483647, %v768
    %v777 = vand.u32 2147483647, %v769
    %v778 = vand.u32 2147483647, %v770
    %v779 = vand.u32 2147483647, %v771
    %v780 = vand.u32 2147483647, %v772
    %v781 = vand.u32 2147483647, %v773
    %v782 = vand.u32 2147483647, %v774
    %v783 = vand.u32 2147483647, %v775
    %v784 = vsub.f32 1.0, %v776
    %v785 = vsub.f32 1.0, %v777
    %v786 = vsub.f32 1.0, %v778
    %v787 = vsub.f32 1.0, %v779
    %v788 = vsub.f32 1.0, %v780
    %v789 = vsub.f32 1.0, %v781
    %v790 = vsub.f32 1.0, %v782
    %v791 = vsub.f32 1.0, %v783
    %v792 = vmul.f32 %v728, %v784
    %v793 = vmul.f32 %v729, %v785
    %v794 = vmul.f32 %v730, %v786
    %v795 = vmul.f32 %v731, %v787
    %v796 = vmul.f32 %v732, %v788
    %v797 = vmul.f32 %v733, %v789
    %v798 = vmul.f32 %v734, %v790
    %v799 = vmul.f32 %v735, %v791
    %v800 = vlaneseq
    %v801 = vshrl.u32 %v800, 7
    %v802 = vsub.s32 3, %v801
    %v803 = vrot.slane %v576, %v802
    %v804 = vlaneseq
    %v805 = vshrl.u32 %v804, 7
    %v806 = vsub.s32 3, %v805
    %v807 = vrot.slane %v577, %v806
    %v808 = vlaneseq
    %v809 = vshrl.u32 %v808, 7
    %v810 = vsub.s32 3, %v809
    %v811 = vrot.slane %v578, %v810
    %v812 = vlaneseq
    %v813 = vshrl.u32 %v812, 7
    %v814 = vsub.s32 3, %v813
    %v815 = vrot.slane %v579, %v814
    %v816 = vlaneseq
    %v817 = vshrl.u32 %v816, 7
    %v818 = vsub.s32 3, %v817
    %v819 = vrot.slane %v580, %v818
    %v820 = vlaneseq
    %v821 = vshrl.u32 %v820, 7
    %v822 = vsub.s32 3, %v821
    %v823 = vrot.slane %v581, %v822
    %v824 = vlaneseq
    %v825 = vshrl.u32 %v824, 7
    %v826 = vsub.s32 3, %v825
    %v827 = vrot.slane %v582, %v826
    %v828 = vlaneseq
    %v829 = vshrl.u32 %v828, 7
    %v830 = vsub.s32 3, %v829
    %v831 = vrot.slane %v583, %v830
    %v832 = vsub.f32 %v803, %v579
    %v833 = vsub.f32 %v807, %v579
    %v834 = vsub.f32 %v811, %v579
    %v835 = vsub.f32 %v815, %v579
    %v836 = vsub.f32 %v819, %v579
    %v837 = vsub.f32 %v823, %v579
    %v838 = vsub.f32 %v827, %v579
    %v839 = vsub.f32 %v831, %v579
    %v840 = vand.u32 2147483647, %v832
    %v841 = vand.u32 2147483647, %v833
    %v842 = vand.u32 2147483647, %v834
    %v843 = vand.u32 2147483647, %v835
    %v844 = vand.u32 2147483647, %v836
    %v845 = vand.u32 2147483647, %v837
    %v846 = vand.u32 2147483647, %v838
    %v847 = vand.u32 2147483647, %v839
    %v848 = vsub.f32 1.0, %v840
    %v849 = vsub.f32 1.0, %v841
    %v850 = vsub.f32 1.0, %v842
    %v851 = vsub.f32 1.0, %v843
    %v852 = vsub.f32 1.0, %v844
    %v853 = vsub.f32 1.0, %v845
    %v854 = vsub.f32 1.0, %v846
    %v855 = vsub.f32 1.0, %v847
    %v856 = vmul.f32 %v792, %v848
    %v857 = vmul.f32 %v793, %v849
    %v858 = vmul.f32 %v794, %v850
    %v859 = vmul.f32 %v795, %v851
    %v860 = vmul.f32 %v796, %v852
    %v861 = vmul.f32 %v797, %v853
    %v862 = vmul.f32 %v798, %v854
    %v863 = vmul.f32 %v799, %v855
    %v864 = vlaneseq
    %v865 = vshrl.u32 %v864, 7
    %v866 = vsub.s32 4, %v865
    %v867 = vrot.slane %v576, %v866
    %v868 = vlaneseq
    %v869 = vshrl.u32 %v868, 7
    %v870 = vsub.s32 4, %v869
    %v871 = vrot.slane %v577, %v870
    %v872 = vlaneseq
    %v873 = vshrl.u32 %v872, 7
    %v874 = vsub.s32 4, %v873
    %v875 = vrot.slane %v578, %v874
    %v876 = vlaneseq
    %v877 = vshrl.u32 %v876, 7
    %v878 = vsub.s32 4, %v877
    %v879 = vrot.slane %v579, %v878
    %v880 = vlaneseq
    %v881 = vshrl.u32 %v880, 7
    %v882 = vsub.s32 4, %v881
    %v883 = vrot.slane %v580, %v882
    %v884 = vlaneseq
    %v885 = vshrl.u32 %v884, 7
    %v886 = vsub.s32 4, %v885
    %v887 = vrot.slane %v581, %v886
    %v888 = vlaneseq
    %v889 = vshrl.u32 %v888, 7
    %v890 = vsub.s32 4, %v889
    %v891 = vrot.slane %v582, %v890
    %v892 = vlaneseq
    %v893 = vshrl.u32 %v892, 7
    %v894 = vsub.s32 4, %v893
    %v895 = vrot.slane %v583, %v894
    %v896 = vsub.f32 %v867, %v580
    %v897 = vsub.f32 %v871, %v580
    %v898 = vsub.f32 %v875, %v580
    %v899 = vsub.f32 %v879, %v580
    %v900 = vsub.f32 %v883, %v580
    %v901 = vsub.f32 %v887, %v580
    %v902 = vsub.f32 %v891, %v580
    %v903 = vsub.f32 %v895, %v580
    %v904 = vand.u32 2147483647, %v896
    %v905 = vand.u32 2147483647, %v897
    %v906 = vand.u32 2147483647, %v898
    %v907 = vand.u32 2147483647, %v899
    %v908 = vand.u32 2147483647, %v900
    %v909 = vand.u32 2147483647, %v901
    %v910 = vand.u32 2147483647, %v902
    %v911 = vand.u32 2147483647, %v903
    %v912 = vsub.f32 1.0, %v904
    %v913 = vsub.f32 1.0, %v905
    %v914 = vsub.f32 1.0, %v906
    %v915 = vsub.f32 1.0, %v907
    %v916 = vsub.f32 1.0, %v908
    %v917 = vsub.f32 1.0, %v909
    %v918 = vsub.f32 1.0, %v910
    %v919 = vsub.f32 1.0, %v911
    %v920 = vmul.f32 %v856, %v912
    %v921 = vmul.f32 %v857, %v913
    %v922 = vmul.f32 %v858, %v914
    %v923 = vmul.f32 %v859, %v915
    %v924 = vmul.f32 %v860, %v916
    %v925 = vmul.f32 %v861, %v917
    %v926 = vmul.f32 %v862, %v918
    %v927 = vmul.f32 %v863, %v919
    %v928 = vlaneseq
    %v929 = vshrl.u32 %v928, 7
    %v930 = vsub.s32 5, %v929
    %v931 = vrot.slane %v576, %v930
    %v932 = vlaneseq
    %v933 = vshrl.u32 %v932, 7
    %v934 = vsub.s32 5, %v933
    %v935 = vrot.slane %v577, %v934
    %v936 = vlaneseq
    %v937 = vshrl.u32 %v936, 7
    %v938 = vsub.s32 5, %v937
    %v939 = vrot.slane %v578, %v938
    %v940 = vlaneseq
    %v941 = vshrl.u32 %v940, 7
    %v942 = vsub.s32 5, %v941
    %v943 = vrot.slane %v579, %v942
    %v944 = vlaneseq
    %v945 = vshrl.u32 %v944, 7
    %v946 = vsub.s32 5, %v945
    %v947 = vrot.slane %v580, %v946
    %v948 = vlaneseq
    %v949 = vshrl.u32 %v948, 7
    %v950 = vsub.s32 5, %v949
    %v951 = vrot.slane %v581, %v950
    %v952 = vlaneseq
    %v953 = vshrl.u32 %v952, 7
    %v954 = vsub.s32 5, %v953
    %v955 = vrot.slane %v582, %v954
    %v956 = vlaneseq
    %v957 = vshrl.u32 %v956, 7
    %v958 = vsub.s32 5, %v957
    %v959 = vrot.slane %v583, %v958
    %v960 = vsub.f32 %v931, %v581
    %v961 = vsub.f32 %v935, %v581
    %v962 = vsub.f32 %v939, %v581
    %v963 = vsub.f32 %v943, %v581
    %v964 = vsub.f32 %v947, %v581
    %v965 = vsub.f32 %v951, %v581
    %v966 = vsub.f32 %v955, %v581
    %v967 = vsub.f32 %v959, %v581
    %v968 = vand.u32 2147483647, %v960
    %v969 = vand.u32 2147483647, %v961
    %v970 = vand.u32 2147483647, %v962
    %v971 = vand.u32 2147483647, %v963
    %v972 = vand.u32 2147483647, %v964
    %v973 = vand.u32 2147483647, %v965
    %v974 = vand.u32 2147483647, %v966
    %v975 = vand.u32 2147483647, %v967
    %v976 = vsub.f32 1.0, %v968
    %v977 = vsub.f32 1.0, %v969
    %v978 = vsub.f32 1.0, %v970
    %v979 = vsub.f32 1.0, %v971
    %v980 = vsub.f32 1.0, %v972
    %v981 = vsub.f32 1.0, %v973
    %v982 = vsub.f32 1.0, %v974
    %v983 = vsub.f32 1.0, %v975
    %v984 = vmul.f32 %v920, %v976
    %v985 = vmul.f32 %v921, %v977
    %v986 = vmul.f32 %v922, %v978
    %v987 = vmul.f32 %v923, %v979
    %v988 = vmul.f32 %v924, %v980
    %v989 = vmul.f32 %v925, %v981
    %v990 = vmul.f32 %v926, %v982
    %v991 = vmul.f32 %v927, %v983
    %v992 = vlaneseq
    %v993 = vshrl.u32 %v992, 7
    %v994 = vsub.s32 6, %v993
    %v995 = vrot.slane %v576, %v994
    %v996 = vlaneseq
    %v997 = vshrl.u32 %v996, 7
    %v998 = vsub.s32 6, %v997
    %v999 = vrot.slane %v577, %v998
    %v1000 = vlaneseq
    %v1001 = vshrl.u32 %v1000, 7
    %v1002 = vsub.s32 6, %v1001
    %v1003 = vrot.slane %v578, %v1002
    %v1004 = vlaneseq
    %v1005 = vshrl.u32 %v1004, 7
    %v1006 = vsub.s32 6, %v1005
    %v1007 = vrot.slane %v579, %v1006
    %v1008 = vlaneseq
    %v1009 = vshrl.u32 %v1008, 7
    %v1010 = vsub.s32 6, %v1009
    %v1011 = vrot.slane %v580, %v1010
    %v1012 = vlaneseq
    %v1013 = vshrl.u32 %v1012, 7
    %v1014 = vsub.s32 6, %v1013
    %v1015 = vrot.slane %v581, %v1014
    %v1016 = vlaneseq
    %v1017 = vshrl.u32 %v1016, 7
    %v1018 = vsub.s32 6, %v1017
    %v1019 = vrot.slane %v582, %v1018
    %v1020 = vlaneseq
    %v1021 = vshrl.u32 %v1020, 7
    %v1022 = vsub.s32 6, %v1021
    %v1023 = vrot.slane %v583, %v1022
    %v1024 = vsub.f32 %v995, %v582
    %v1025 = vsub.f32 %v999, %v582
    %v1026 = vsub.f32 %v1003, %v582
    %v1027 = vsub.f32 %v1007, %v582
    %v1028 = vsub.f32 %v1011, %v582
    %v1029 = vsub.f32 %v1015, %v582
    %v1030 = vsub.f32 %v1019, %v582
    %v1031 = vsub.f32 %v1023, %v582
    %v1032 = vand.u32 2147483647, %v1024
    %v1033 = vand.u32 2147483647, %v1025
    %v1034 = vand.u32 2147483647, %v1026
    %v1035 = vand.u32 2147483647, %v1027
    %v1036 = vand.u32 2147483647, %v1028
    %v1037 = vand.u32 2147483647, %v1029
    %v1038 = vand.u32 2147483647, %v1030
    %v1039 = vand.u32 2147483647, %v1031
    %v1040 = vsub.f32 1.0, %v1032
    %v1041 = vsub.f32 1.0, %v1033
    %v1042 = vsub.f32 1.0, %v1034
    %v1043 = vsub.f32 1.0, %v1035
    %v1044 = vsub.f32 1.0, %v1036
    %v1045 = vsub.f32 1.0, %v1037
    %v1046 = vsub.f32 1.0, %v1038
    %v1047 = vsub.f32 1.0, %v1039
    %v1048 = vmul.f32 %v984, %v1040
    %v1049 = vmul.f32 %v985, %v1041
    %v1050 = vmul.f32 %v986, %v1042
    %v1051 = vmul.f32 %v987, %v1043
    %v1052 = vmul.f32 %v988, %v1044
    %v1053 = vmul.f32 %v989, %v1045
    %v1054 = vmul.f32 %v990, %v1046
    %v1055 = vmul.f32 %v991, %v1047
    %v1056 = vlaneseq
    %v1057 = vshrl.u32 %v1056, 7
    %v1058 = vsub.s32 7, %v1057
    %v1059 = vrot.slane %v576, %v1058
    %v1060 = vlaneseq
    %v1061 = vshrl.u32 %v1060, 7
    %v1062 = vsub.s32 7, %v1061
    %v1063 = vrot.slane %v577, %v1062
    %v1064 = vlaneseq
    %v1065 = vshrl.u32 %v1064, 7
    %v1066 = vsub.s32 7, %v1065
    %v1067 = vrot.slane %v578, %v1066
    %v1068 = vlaneseq
    %v1069 = vshrl.u32 %v1068, 7
    %v1070 = vsub.s32 7, %v1069
    %v1071 = vrot.slane %v579, %v1070
    %v1072 = vlaneseq
    %v1073 = vshrl.u32 %v1072, 7
    %v1074 = vsub.s32 7, %v1073
    %v1075 = vrot.slane %v580, %v1074
    %v1076 = vlaneseq
    %v1077 = vshrl.u32 %v1076, 7
    %v1078 = vsub.s32 7, %v1077
    %v1079 = vrot.slane %v581, %v1078
    %v1080 = vlaneseq
    %v1081 = vshrl.u32 %v1080, 7
    %v1082 = vsub.s32 7, %v1081
    %v1083 = vrot.slane %v582, %v1082
    %v1084 = vlaneseq
    %v1085 = vshrl.u32 %v1084, 7
    %v1086 = vsub.s32 7, %v1085
    %v1087 = vrot.slane %v583, %v1086
    %v1088 = vsub.f32 %v1059, %v583
    %v1089 = vsub.f32 %v1063, %v583
    %v1090 = vsub.f32 %v1067, %v583
    %v1091 = vsub.f32 %v1071, %v583
    %v1092 = vsub.f32 %v1075, %v583
    %v1093 = vsub.f32 %v1079, %v583
    %v1094 = vsub.f32 %v1083, %v583
    %v1095 = vsub.f32 %v1087, %v583
    %v1096 = vand.u32 2147483647, %v1088
    %v1097 = vand.u32 2147483647, %v1089
    %v1098 = vand.u32 2147483647, %v1090
    %v1099 = vand.u32 2147483647, %v1091
    %v1100 = vand.u32 2147483647, %v1092
    %v1101 = vand.u32 2147483647, %v1093
    %v1102 = vand.u32 2147483647, %v1094
    %v1103 = vand.u32 2147483647, %v1095
    %v1104 = vsub.f32 1.0, %v1096
    %v1105 = vsub.f32 1.0, %v1097
    %v1106 = vsub.f32 1.0, %v1098
    %v1107 = vsub.f32 1.0, %v1099
    %v1108 = vsub.f32 1.0, %v1100
    %v1109 = vsub.f32 1.0, %v1101
    %v1110 = vsub.f32 1.0, %v1102
    %v1111 = vsub.f32 1.0, %v1103
    %v1112 = vmul.f32 %v1048, %v1104
    %v1113 = vmul.f32 %v1049, %v1105
    %v1114 = vmul.f32 %v1050, %v1106
    %v1115 = vmul.f32 %v1051, %v1107
    %v1116 = vmul.f32 %v1052, %v1108
    %v1117 = vmul.f32 %v1053, %v1109
    %v1118 = vmul.f32 %v1054, %v1110
    %v1119 = vmul.f32 %v1055, %v1111
    %v1120 = vadd.f32 %v1112, %v1113
    %v1121 = vadd.f32 %v1120, %v1114
    %v1122 = vadd.f32 %v1121, %v1115
    %v1123 = vadd.f32 %v1122, %v1116
    %v1124 = vadd.f32 %v1123, %v1117
    %v1125 = vadd.f32 %v1124, %v1118
    %v1126 = vadd.f32 %v1125, %v1119
    %v1127 = vrot.slane %v1112, 4
    %v1128 = vadd.f32 %v1112, %v1127
    %v1129 = vrot.slane %v1128, 2
    %v1130 = vadd.f32 %v1128, %v1129
    %v1131 = vrot.slane %v1130, 1
    %v1132 = vadd.f32 %v1130, %v1131
    %v1133 = vrot.slane %v1113, 4
    %v1134 = vadd.f32 %v1113, %v1133
    %v1135 = vrot.slane %v1134, 2
    %v1136 = vadd.f32 %v1134, %v1135
    %v1137 = vrot.slane %v1136, 1
    %v1138 = vadd.f32 %v1136, %v1137
    %v1139 = vrot.slane %v1114, 4
    %v1140 = vadd.f32 %v1114, %v1139
    %v1141 = vrot.slane %v1140, 2
    %v1142 = vadd.f32 %v1140, %v1141
    %v1143 = vrot.slane %v1142, 1
    %v1144 = vadd.f32 %v1142, %v1143
    %v1145 = vrot.slane %v1115, 4
    %v1146 = vadd.f32 %v1115, %v1145
    %v1147 = vrot.slane %v1146, 2
    %v1148 = vadd.f32 %v1146, %v1147
    %v1149 = vrot.slane %v1148, 1
    %v1150 = vadd.f32 %v1148, %v1149
    %v1151 = vrot.slane %v1116, 4
    %v1152 = vadd.f32 %v1116, %v1151
    %v1153 = vrot.slane %v1152, 2
    %v1154 = vadd.f32 %v1152, %v1153
    %v1155 = vrot.slane %v1154, 1
    %v1156 = vadd.f32 %v1154, %v1155
    %v1157 = vrot.slane %v1117, 4
    %v1158 = vadd.f32 %v1117, %v1157
    %v1159 = vrot.slane %v1158, 2
    %v1160 = vadd.f32 %v1158, %v1159
    %v1161 = vrot.slane %v1160, 1
    %v1162 = vadd.f32 %v1160, %v1161
    %v1163 = vrot.slane %v1118, 4
    %v1164 = vadd.f32 %v1118, %v1163
    %v1165 = vrot.slane %v1164, 2
    %v1166 = vadd.f32 %v1164, %v1165
    %v1167 = vrot.slane %v1166, 1
    %v1168 = vadd.f32 %v1166, %v1167
    %v1169 = vrot.slane %v1119, 4
    %v1170 = vadd.f32 %v1119, %v1169
    %v1171 = vrot.slane %v1170, 2
    %v1172 = vadd.f32 %v1170, %v1171
    %v1173 = vrot.slane %v1172, 1
    %v1174 = vadd.f32 %v1172, %v1173
    %v1175 = vrcp.pop %v1126
    %v1176 = vmul.f32 %v1126, %v1175
    %v1177 = vsub.f32 2.0, %v1176
    %v1178 = vmul.f32 %v1175, %v1177
    %v1179 = vrcp.pop %v1132
    %v1180 = vrcp.pop %v1138
    %v1181 = vrcp.pop %v1144
    %v1182 = vrcp.pop %v1150
    %v1183 = vrcp.pop %v1156
    %v1184 = vrcp.pop %v1162
    %v1185 = vrcp.pop %v1168
    %v1186 = vrcp.pop %v1174
    %v1187 = vmul.f32 %v1132, %v1179
    %v1188 = vmul.f32 %v1138, %v1180
    %v1189 = vmul.f32 %v1144, %v1181
    %v1190 = vmul.f32 %v1150, %v1182
    %v1191 = vmul.f32 %v1156, %v1183
    %v1192 = vmul.f32 %v1162, %v1184
    %v1193 = vmul.f32 %v1168, %v1185
    %v1194 = vmul.f32 %v1174, %v1186
    %v1195 = vsub.f32 2.0, %v1187
    %v1196 = vsub.f32 2.0, %v1188
    %v1197 = vsub.f32 2.0, %v1189
    %v1198 = vsub.f32 2.0, %v1190
    %v1199 = vsub.f32 2.0, %v1191
    %v1200 = vsub.f32 2.0, %v1192
    %v1201 = vsub.f32 2.0, %v1193
    %v1202 = vsub.f32 2.0, %v1194
    %v1203 = vmul.f32 %v1179, %v1195
    %v1204 = vmul.f32 %v1180, %v1196
    %v1205 = vmul.f32 %v1181, %v1197
    %v1206 = vmul.f32 %v1182, %v1198
    %v1207 = vmul.f32 %v1183, %v1199
    %v1208 = vmul.f32 %v1184, %v1200
    %v1209 = vmul.f32 %v1185, %v1201
    %v1210 = vmul.f32 %v1186, %v1202
    %v1211 = vmul.f32 %v1203, %v1178
    %v1212 = vmul.f32 %v1204, %v1178
    %v1213 = vmul.f32 %v1205, %v1178
    %v1214 = vmul.f32 %v1206, %v1178
    %v1215 = vmul.f32 %v1207, %v1178
    %v1216 = vmul.f32 %v1208, %v1178
    %v1217 = vmul.f32 %v1209, %v1178
    %v1218 = vmul.f32 %v1210, %v1178
    %v1219 = vmul.f32 %v576, %v1211
    %v1220 = vmul.f32 %v577, %v1212
    %v1221 = vmul.f32 %v578, %v1213
    %v1222 = vmul.f32 %v579, %v1214
    %v1223 = vmul.f32 %v580, %v1215
    %v1224 = vmul.f32 %v581, %v1216
    %v1225 = vmul.f32 %v582, %v1217
    %v1226 = vmul.f32 %v583, %v1218
    %v1227 = vmul.f32 %v90, %v90
    %v1228 = vmul.f32 %v1227, %v1178
    %v1229 = vadd.f32 %v1219, %v1220
    %v1230 = vadd.f32 %v1229, %v1221
    %v1231 = vadd.f32 %v1230, %v1222
    %v1232 = vadd.f32 %v1231, %v1223
    %v1233 = vadd.f32 %v1232, %v1224
    %v1234 = vadd.f32 %v1233, %v1225
    %v1235 = vadd.f32 %v1234, %v1226
    %v1236 = vrot.slane %v1235, 4
    %v1237 = vadd.f32 %v1235, %v1236
    %v1238 = vrot.slane %v1237, 2
    %v1239 = vadd.f32 %v1237, %v1238
    %v1240 = vrot.slane %v1239, 1
    %v1241 = vadd.f32 %v1239, %v1240
    %v1242 = vrot.slane %v1228, 4
    %v1243 = vadd.f32 %v1228, %v1242
    %v1244 = vrot.slane %v1243, 2
    %v1245 = vadd.f32 %v1243, %v1244
    %v1246 = vrot.slane %v1245, 1
    %v1247 = vadd.f32 %v1245, %v1246
    %v1248 = vadd.f32 %v1241, %v1247
    %v1249 = vadd.f32 %v1248, 1e-20
    %v1250 = vrsqrt.pop %v1249
    %v1251 = vmul.f32 %v1249, %v1250
    %vm1252 = vcmp.eq.f32.partialorder %v1249, inf
    %v1253 = vsel %vm1252, %v1249, %v1251
    %vm1254 = vcmp.eq.f32.partialorder %v1249, 0.0
    %v1255 = vand.u32 %v1249, 2147483648
    %v1256 = vsel %vm1254, %v1255, %v1253
    %v1257 = vmax.f32 %v1256, 0.0
    %v1258 = vmin.f32 %v1257, 8.0
    %v1259 = vfloor.f32 %v1258
    %v1260 = vsub.f32 %v1258, %v1259
    %v1261 = vcvt.f32.s32.to.zero.pseudo %v1259
    %v1262 = vlaneseq
    %v1263 = vshrl.u32 %v1262, 7
    %v1264 = vadd.s32 %v1263, 8
    %vm1265 = vcmp.lt.s32.totalorder %v1261, 8
    %v1266 = vsel %vm1265, %v1261, 8
    %vm1267 = vcmp.eq.s32.totalorder %v1263, %v1266
    %vm1268 = vcmp.eq.s32.totalorder %v1264, %v1266
    %v1269 = vsel %vm1267, 1, 0
    %v1270 = vsel %vm1268, 1, 0
    %v1271 = vcvt.s32.f32 %v1269
    %v1272 = vcvt.s32.f32 %v1270
    %v1273 = vadd.s32 %v1261, 1
    %vm1274 = vcmp.lt.s32.totalorder %v1273, 8
    %v1275 = vsel %vm1274, %v1273, 8
    %vm1276 = vcmp.eq.s32.totalorder %v1263, %v1275
    %vm1277 = vcmp.eq.s32.totalorder %v1264, %v1275
    %v1278 = vsel %vm1276, 1, 0
    %v1279 = vsel %vm1277, 1, 0
    %v1280 = vcvt.s32.f32 %v1278
    %v1281 = vcvt.s32.f32 %v1279
    %v1282 = vsub.f32 1.0, %v1260
    %v1283 = vmul.f32 %v1282, %v1271
    %v1284 = vmul.f32 %v1282, %v1272
    %v1285 = vmul.f32 %v1260, %v1280
    %v1286 = vmul.f32 %v1260, %v1281
    %v1287 = vadd.f32 %v1283, %v1285
    %v1288 = vadd.f32 %v1284, %v1286
    %v1289 = vsub.f32 %v90, 0.5
    %v1290 = vand.u32 2147483647, %v1289
    %v1291 = vsub.f32 %v512, 0.5
    %v1292 = vsub.f32 %v513, 0.5
    %v1293 = vsub.f32 %v514, 0.5
    %v1294 = vsub.f32 %v515, 0.5
    %v1295 = vsub.f32 %v516, 0.5
    %v1296 = vsub.f32 %v517, 0.5
    %v1297 = vsub.f32 %v518, 0.5
    %v1298 = vsub.f32 %v519, 0.5
    %v1299 = vand.u32 2147483647, %v1291
    %v1300 = vand.u32 2147483647, %v1292
    %v1301 = vand.u32 2147483647, %v1293
    %v1302 = vand.u32 2147483647, %v1294
    %v1303 = vand.u32 2147483647, %v1295
    %v1304 = vand.u32 2147483647, %v1296
    %v1305 = vand.u32 2147483647, %v1297
    %v1306 = vand.u32 2147483647, %v1298
    %v1307 = vrot.slane %v1290, 4
    %v1308 = vadd.f32 %v1290, %v1307
    %v1309 = vrot.slane %v1308, 2
    %v1310 = vadd.f32 %v1308, %v1309
    %v1311 = vrot.slane %v1310, 1
    %v1312 = vadd.f32 %v1310, %v1311
    %v1313 = vmul.f32 %v1312, 0.125
    %v1314 = vadd.f32 %v1299, %v1300
    %v1315 = vadd.f32 %v1314, %v1301
    %v1316 = vadd.f32 %v1315, %v1302
    %v1317 = vadd.f32 %v1316, %v1303
    %v1318 = vadd.f32 %v1317, %v1304
    %v1319 = vadd.f32 %v1318, %v1305
    %v1320 = vadd.f32 %v1319, %v1306
    %v1321 = vrot.slane %v1320, 4
    %v1322 = vadd.f32 %v1320, %v1321
    %v1323 = vrot.slane %v1322, 2
    %v1324 = vadd.f32 %v1322, %v1323
    %v1325 = vrot.slane %v1324, 1
    %v1326 = vadd.f32 %v1324, %v1325
    %v1327 = vmul.f32 %v1326, 0.015625
    %v1328 = vadd.f32 %v1313, %v1327
    %v1329 = vmul.f32 %v1287, %v1328
    %v1330 = vmul.f32 %v1288, %v1328
    %v1331 = vld [vmem:[%s2] sm:$0xff]
    %v1332 = vld [vmem:[%s2 + $0x8] sm:$0x1]
    %v1333 = vld [vmem:[%s3] sm:$0xff]
    %v1334 = vld [vmem:[%s3 + $0x8] sm:$0x1]
    %1336 = vset.pattern.permute.xlu0 0
    %1337 = vperm.xlu0 %1336, %v1331
    %v1338 = vpop.permute.xlu0 %1337
    %1341 = vset.pattern.permute.xlu0 0
    %1342 = vperm.xlu0 %1341, %v1332
    %v1343 = vpop.permute.xlu0 %1342
    %v1345 = vlaneseq
    %v1346 = vshrl.u32 %v1345, 7
    %v1347 = vsub.s32 0, %v1346
    %v1348 = vrot.slane %v1329, %v1347
    %v1349 = vmul.f32 %v1338, %v1348
    %v1350 = vmul.f32 %v1343, %v1348
    %1352 = vset.pattern.permute.xlu0 0
    %1353 = vperm.xlu0 %1352, %v1333
    %v1354 = vpop.permute.xlu0 %1353
    %1357 = vset.pattern.permute.xlu0 0
    %1358 = vperm.xlu0 %1357, %v1334
    %v1359 = vpop.permute.xlu0 %1358
    %v1361 = vadd.f32 %v1354, %v1349
    %v1362 = vadd.f32 %v1359, %v1350
    %1363 = vset.pattern.permute.xlu0 1
    %1364 = vperm.xlu0 %1363, %v1331
    %v1365 = vpop.permute.xlu0 %1364
    %1367 = vset.pattern.permute.xlu0 1
    %1368 = vperm.xlu0 %1367, %v1332
    %v1369 = vpop.permute.xlu0 %1368
    %v1371 = vlaneseq
    %v1372 = vshrl.u32 %v1371, 7
    %v1373 = vsub.s32 1, %v1372
    %v1374 = vrot.slane %v1329, %v1373
    %v1375 = vmul.f32 %v1365, %v1374
    %v1376 = vmul.f32 %v1369, %v1374
    %v1377 = vadd.f32 %v1361, %v1375
    %v1378 = vadd.f32 %v1362, %v1376
    %1379 = vset.pattern.permute.xlu0 2
    %1380 = vperm.xlu0 %1379, %v1331
    %v1381 = vpop.permute.xlu0 %1380
    %1383 = vset.pattern.permute.xlu0 2
    %1384 = vperm.xlu0 %1383, %v1332
    %v1385 = vpop.permute.xlu0 %1384
    %v1387 = vlaneseq
    %v1388 = vshrl.u32 %v1387, 7
    %v1389 = vsub.s32 2, %v1388
    %v1390 = vrot.slane %v1329, %v1389
    %v1391 = vmul.f32 %v1381, %v1390
    %v1392 = vmul.f32 %v1385, %v1390
    %v1393 = vadd.f32 %v1377, %v1391
    %v1394 = vadd.f32 %v1378, %v1392
    %1395 = vset.pattern.permute.xlu0 3
    %1396 = vperm.xlu0 %1395, %v1331
    %v1397 = vpop.permute.xlu0 %1396
    %1399 = vset.pattern.permute.xlu0 3
    %1400 = vperm.xlu0 %1399, %v1332
    %v1401 = vpop.permute.xlu0 %1400
    %v1403 = vlaneseq
    %v1404 = vshrl.u32 %v1403, 7
    %v1405 = vsub.s32 3, %v1404
    %v1406 = vrot.slane %v1329, %v1405
    %v1407 = vmul.f32 %v1397, %v1406
    %v1408 = vmul.f32 %v1401, %v1406
    %v1409 = vadd.f32 %v1393, %v1407
    %v1410 = vadd.f32 %v1394, %v1408
    %1411 = vset.pattern.permute.xlu0 4
    %1412 = vperm.xlu0 %1411, %v1331
    %v1413 = vpop.permute.xlu0 %1412
    %1415 = vset.pattern.permute.xlu0 4
    %1416 = vperm.xlu0 %1415, %v1332
    %v1417 = vpop.permute.xlu0 %1416
    %v1419 = vlaneseq
    %v1420 = vshrl.u32 %v1419, 7
    %v1421 = vsub.s32 4, %v1420
    %v1422 = vrot.slane %v1329, %v1421
    %v1423 = vmul.f32 %v1413, %v1422
    %v1424 = vmul.f32 %v1417, %v1422
    %v1425 = vadd.f32 %v1409, %v1423
    %v1426 = vadd.f32 %v1410, %v1424
    %1427 = vset.pattern.permute.xlu0 5
    %1428 = vperm.xlu0 %1427, %v1331
    %v1429 = vpop.permute.xlu0 %1428
    %1431 = vset.pattern.permute.xlu0 5
    %1432 = vperm.xlu0 %1431, %v1332
    %v1433 = vpop.permute.xlu0 %1432
    %v1435 = vlaneseq
    %v1436 = vshrl.u32 %v1435, 7
    %v1437 = vsub.s32 5, %v1436
    %v1438 = vrot.slane %v1329, %v1437
    %v1439 = vmul.f32 %v1429, %v1438
    %v1440 = vmul.f32 %v1433, %v1438
    %v1441 = vadd.f32 %v1425, %v1439
    %v1442 = vadd.f32 %v1426, %v1440
    %1443 = vset.pattern.permute.xlu0 6
    %1444 = vperm.xlu0 %1443, %v1331
    %v1445 = vpop.permute.xlu0 %1444
    %1447 = vset.pattern.permute.xlu0 6
    %1448 = vperm.xlu0 %1447, %v1332
    %v1449 = vpop.permute.xlu0 %1448
    %v1451 = vlaneseq
    %v1452 = vshrl.u32 %v1451, 7
    %v1453 = vsub.s32 6, %v1452
    %v1454 = vrot.slane %v1329, %v1453
    %v1455 = vmul.f32 %v1445, %v1454
    %v1456 = vmul.f32 %v1449, %v1454
    %v1457 = vadd.f32 %v1441, %v1455
    %v1458 = vadd.f32 %v1442, %v1456
    %1459 = vset.pattern.permute.xlu0 7
    %1460 = vperm.xlu0 %1459, %v1331
    %v1461 = vpop.permute.xlu0 %1460
    %1463 = vset.pattern.permute.xlu0 7
    %1464 = vperm.xlu0 %1463, %v1332
    %v1465 = vpop.permute.xlu0 %1464
    %v1467 = vlaneseq
    %v1468 = vshrl.u32 %v1467, 7
    %v1469 = vsub.s32 7, %v1468
    %v1470 = vrot.slane %v1329, %v1469
    %v1471 = vmul.f32 %v1461, %v1470
    %v1472 = vmul.f32 %v1465, %v1470
    %v1473 = vadd.f32 %v1457, %v1471
    %v1474 = vadd.f32 %v1458, %v1472
    %1475 = vset.pattern.permute.xlu0 8
    %1476 = vperm.xlu0 %1475, %v1331
    %v1477 = vpop.permute.xlu0 %1476
    %1479 = vset.pattern.permute.xlu0 8
    %1480 = vperm.xlu0 %1479, %v1332
    %v1481 = vpop.permute.xlu0 %1480
    %v1483 = vlaneseq
    %v1484 = vshrl.u32 %v1483, 7
    %v1485 = vsub.s32 0, %v1484
    %v1486 = vrot.slane %v1330, %v1485
    %v1487 = vmul.f32 %v1477, %v1486
    %v1488 = vmul.f32 %v1481, %v1486
    %v1489 = vadd.f32 %v1473, %v1487
    %v1490 = vadd.f32 %v1474, %v1488
    %1491 = vst [vmem:[#allocation7] sm:$0xff] %v1489
    %1492 = vst [vmem:[#allocation7 + $0x8] sm:$0x1] %v1490
    // Predicated region
    $region26: #{tpu_custom_call.1} parent=1 // pred_check
      _
    $region27: #{tpu_custom_call.1} parent=1 // pred_check_branch
      %1494 = sbr.rel (0) target = $region29
    $region28: #{tpu_custom_call.1} parent=1 // pred_region
      %s1496 = ssub.s32 256, 256
      %1497 = vsyncadd [#allocation4], %s1496
      %s1498 = sshll.u32 [#allocation7], 4
      %s1499 = int_to_ptr.vmem [resolvable:$true] %s1498
      %1504 = dma.vmem_to_hbm [thread:$0]  %s1499, 256, %s4, [#allocation4], 128, 128, 8
    $region29: #{tpu_custom_call.1} parent=1 // pred_fallthru
      _
    // Predicated region
    $region30: #{tpu_custom_call.1} parent=1 // pred_check
      _
    $region31: #{tpu_custom_call.1} parent=1 // pred_check_branch
      %1506 = sbr.rel (0) target = $region33
    $region32: #{tpu_custom_call.1} parent=1 // pred_region
      %1507 = dma.done [#allocation4], 256
    $region33: #{tpu_custom_call.1} parent=1 // pred_fallthru
      _
    %1508 = vsyncpa [#allocation3], 1
    %1509 = vsyncpa [#allocation6], 1
    %1510 = vsyncpa [#allocation4], 1

</llo_original>
